<compile_context>
chip_gen: v7x
topology: tpu7x:2x2x1
jax: 0.10.0
libtpu: 0.0.40
codegen_flags: <defaults>
</compile_context>

<pallas_src>
import functools

import jax
import jax.numpy as jnp
from jax.experimental import pallas as pl
from jax.experimental.pallas import tpu as pltpu

EPS = 1e-5
NEG_SLOPE = 0.2


def _leaky_relu(v):
    return jnp.where(v >= 0, v, NEG_SLOPE * v)


def _im2col_3x3_flat(v, W, left_valid, right_valid):
    """im2col for a 3x3 / stride 1 / pad 1 conv, pixels flattened on the lane axis.

    v:           (C, H*W) f32, pixel p = h*W + w on the 128-lane axis.
    left_valid:  (1, H*W) f32, 0.0 where w == 0, else 1.0
    right_valid: (1, H*W) f32, 0.0 where w == W-1, else 1.0
    returns      (9*C, H*W): rows [k*C:(k+1)*C] hold v shifted by tap
                 k = dy*3 + dx (dy, dx in 0..2), zero outside the image.
    """
    C, HW = v.shape
    pad = -(-(W + 1) // 128) * 128           # lane-aligned zero halo, >= W+1
    z = jnp.zeros((C, pad), v.dtype)
    vp = jnp.concatenate([z, v, z], axis=1)  # (C, HW + 2*pad)
    taps = []
    for dy in range(3):
        for dx in range(3):
            off = (dy - 1) * W + (dx - 1)
            t = vp[:, pad + off:pad + off + HW]   # static lane shift
            if dx == 0:                            # column w-1 is OOB at w == 0
                t = t * left_valid
            elif dx == 2:                          # column w+1 is OOB at w == W-1
                t = t * right_valid
            taps.append(t)
    return jnp.concatenate(taps, axis=0)           # sublane-axis concat -> (9*C, HW)


# --------------------------- pass 1: conv1 + conv_expand ------------------------
def _conv1_ident_kernel(x_ref, w_ref, mask_ref,
                        pre1_ref, ident_ref, s1_ref, ss1_ref, *, W):
    # x_ref:     (1, Cin, HW)        f32   one image, pixels on lanes
    # w_ref:     (Cmid+Cout, 9*Cin)  bf16  [conv1 | conv_expand@centre-tap]^T
    # mask_ref:  (2, HW)             f32   row 0: w>0 valid, row 1: w<W-1 valid
    # pre1_ref:  (1, Cmid, HW)       f32   conv1 pre-BN output
    # ident_ref: (1, Cout, HW)       f32   conv_expand(x)
    # s1_ref:    (1, Cmid, 1)        f32   per-image sum of pre1
    # ss1_ref:   (1, Cmid, 1)        f32   per-image sum of pre1^2
    Cmid = pre1_ref.shape[1]
    patch = _im2col_3x3_flat(x_ref[0], W, mask_ref[0:1, :], mask_ref[1:2, :])
    acc = jnp.dot(w_ref[...], patch.astype(jnp.bfloat16),
                  preferred_element_type=jnp.float32)       # (Cmid+Cout, HW) f32
    pre1 = acc[:Cmid, :]
    pre1_ref[0] = pre1
    ident_ref[0] = acc[Cmid:, :]          # 1x1 conv_expand fused into the same matmul
    s1_ref[0] = jnp.sum(pre1, axis=1, keepdims=True)
    ss1_ref[0] = jnp.sum(pre1 * pre1, axis=1, keepdims=True)


# ----------------------- pass 2: bn1 + LeakyReLU + conv2 ------------------------
def _bn1_conv2_kernel(pre1_ref, sc1_ref, sh1_ref, w2_ref, mask_ref,
                      pre2_ref, s2_ref, ss2_ref, *, W):
    # bn1 folded to per-channel scale/shift column vectors (broadcast over lanes)
    h = _leaky_relu(pre1_ref[0] * sc1_ref[...] + sh1_ref[...])   # (Cmid, HW) f32
    patch = _im2col_3x3_flat(h, W, mask_ref[0:1, :], mask_ref[1:2, :])
    acc = jnp.dot(w2_ref[...], patch.astype(jnp.bfloat16),
                  preferred_element_type=jnp.float32)            # (Cout, HW) f32
    pre2_ref[0] = acc
    s2_ref[0] = jnp.sum(acc, axis=1, keepdims=True)
    ss2_ref[0] = jnp.sum(acc * acc, axis=1, keepdims=True)


# --------------------- pass 3: bn2 + residual add + LeakyReLU -------------------
def _bn2_add_kernel(pre2_ref, ident_ref, sc2_ref, sh2_ref, out_ref):
    o = pre2_ref[0] * sc2_ref[...] + sh2_ref[...] + ident_ref[0]
    out_ref[0] = _leaky_relu(o).astype(out_ref.dtype)            # lane-dense store


def _bn_fold(s, ss, gamma, beta, count):
    """Cross-tile BN reduction: per-image (sum, sumsq) -> folded (scale, shift)."""
    mean = jnp.sum(s[:, :, 0], axis=0) / count
    var = jnp.sum(ss[:, :, 0], axis=0) / count - mean * mean     # biased (training BN)
    scale = gamma * jax.lax.rsqrt(var + EPS)
    shift = beta - mean * scale
    return scale.reshape(-1, 1), shift.reshape(-1, 1)


@jax.jit
def residual_block(x_nchw, wexp, w1_hwio, g1, b1, w2_hwio, g2, b2):
    """ResidualBlock forward.  x_nchw: (N, Cin, H, W) (PyTorch layout).
    wexp: (Cin, Cout) conv_expand weight, or None when inc == outc.
    w1_hwio: (3,3,Cin,Cmid), w2_hwio: (3,3,Cmid,Cout); g*/b*: BN affine params."""
    N, Cin, H, Wd = x_nchw.shape
    Cmid = w1_hwio.shape[-1]
    Cout = w2_hwio.shape[-1]
    HW = H * Wd
    count = jnp.float32(N * HW)

    if wexp is None:                        # inc == outc: module has no conv_expand
        wexp = jnp.eye(Cin, Cout, dtype=x_nchw.dtype)

    # im2col-concatenated weights, conv_expand folded onto the centre tap (tap 4),
    # transposed for the channels-on-sublanes layout, bf16 for the MXU.
    w1_cat = w1_hwio.reshape(9 * Cin, Cmid)
    exp_cat = jnp.zeros((9 * Cin, Cout), w1_cat.dtype)
    exp_cat = exp_cat.at[4 * Cin:5 * Cin, :].set(wexp)
    w1c_t = jnp.concatenate([w1_cat, exp_cat], axis=1).T.astype(jnp.bfloat16)  # (Cmid+Cout, 9*Cin)
    w2_t = w2_hwio.reshape(9 * Cmid, Cout).T.astype(jnp.bfloat16)              # (Cout, 9*Cmid)

    # {0,1} column-validity masks for the dx=0 / dx=2 taps of the 3x3 stencil.
    col = jnp.arange(HW, dtype=jnp.int32) % Wd
    mask = jnp.stack([(col != 0), (col != Wd - 1)]).astype(jnp.float32)        # (2, HW)

    x_f = x_nchw.reshape(N, Cin, HW)        # free bitcast: pixels onto the lane axis

    params = pltpu.CompilerParams(
        dimension_semantics=("parallel",),           # batch axis -> v7x megacore
        vmem_limit_bytes=48 * 1024 * 1024)           # sized against v7x's 64 MiB VMEM

    img = lambda n: (n, 0, 0)                        # per-image block
    rep = lambda n: (0, 0)                           # broadcast (weights/masks/scales)

    # ---- pass 1: conv1 + conv_expand (one MXU matmul) + partial BN1 stats ------
    pre1, ident, s1, ss1 = pl.pallas_call(
        functools.partial(_conv1_ident_kernel, W=Wd),
        grid=(N,),
        in_specs=[pl.BlockSpec((1, Cin, HW), img),
                  pl.BlockSpec((Cmid + Cout, 9 * Cin), rep),
                  pl.BlockSpec((2, HW), rep)],
        out_specs=(pl.BlockSpec((1, Cmid, HW), img),
                   pl.BlockSpec((1, Cout, HW), img),
                   pl.BlockSpec((1, Cmid, 1), img),
                   pl.BlockSpec((1, Cmid, 1), img)),
        out_shape=(jax.ShapeDtypeStruct((N, Cmid, HW), jnp.float32),
                   jax.ShapeDtypeStruct((N, Cout, HW), jnp.float32),
                   jax.ShapeDtypeStruct((N, Cmid, 1), jnp.float32),
                   jax.ShapeDtypeStruct((N, Cmid, 1), jnp.float32)),
        compiler_params=params,
    )(x_f, w1c_t, mask)

    # ---- tiny cross-tile BN1 reduction (exact batch statistics under tiling) ---
    sc1, sh1 = _bn_fold(s1, ss1, g1, b1, count)

    # ---- pass 2: bn1 + LeakyReLU + conv2 (one MXU matmul) + partial BN2 stats --
    pre2, s2, ss2 = pl.pallas_call(
        functools.partial(_bn1_conv2_kernel, W=Wd),
        grid=(N,),
        in_specs=[pl.BlockSpec((1, Cmid, HW), img),
                  pl.BlockSpec((Cmid, 1), rep),
                  pl.BlockSpec((Cmid, 1), rep),
                  pl.BlockSpec((Cout, 9 * Cmid), rep),
                  pl.BlockSpec((2, HW), rep)],
        out_specs=(pl.BlockSpec((1, Cout, HW), img),
                   pl.BlockSpec((1, Cout, 1), img),
                   pl.BlockSpec((1, Cout, 1), img)),
        out_shape=(jax.ShapeDtypeStruct((N, Cout, HW), jnp.float32),
                   jax.ShapeDtypeStruct((N, Cout, 1), jnp.float32),
                   jax.ShapeDtypeStruct((N, Cout, 1), jnp.float32)),
        compiler_params=params,
    )(pre1, sc1, sh1, w2_t, mask)

    sc2, sh2 = _bn_fold(s2, ss2, g2, b2, count)

    # ---- pass 3: bn2 + residual add + LeakyReLU (lane-dense epilogue store) ----
    out_f = pl.pallas_call(
        _bn2_add_kernel,
        grid=(N,),
        in_specs=[pl.BlockSpec((1, Cout, HW), img),
                  pl.BlockSpec((1, Cout, HW), img),
                  pl.BlockSpec((Cout, 1), rep),
                  pl.BlockSpec((Cout, 1), rep)],
        out_specs=pl.BlockSpec((1, Cout, HW), img),
        out_shape=jax.ShapeDtypeStruct((N, Cout, HW), x_nchw.dtype),
        compiler_params=params,
    )(pre2, ident, sc2, sh2)

    return out_f.reshape(N, Cout, H, Wd)    # free bitcast back to NCHW


def reference(x_nchw, wexp, w1_hwio, g1, b1, w2_hwio, g2, b2):
    """Pure-JAX f32 reference (lax convs), same semantics as the PyTorch module."""
    dn = ('NCHW', 'HWIO', 'NCHW')
    Cin, Cout = wexp.shape

    def bn(v, g, bta):
        mean = v.mean(axis=(0, 2, 3), keepdims=True)
        var = ((v - mean) ** 2).mean(axis=(0, 2, 3), keepdims=True)
        return ((v - mean) * jax.lax.rsqrt(var + EPS) * g.reshape(1, -1, 1, 1)
                + bta.reshape(1, -1, 1, 1))

    ident = jax.lax.conv_general_dilated(
        x_nchw, wexp.reshape(1, 1, Cin, Cout), (1, 1), 'SAME', dimension_numbers=dn)
    h = _leaky_relu(bn(jax.lax.conv_general_dilated(
        x_nchw, w1_hwio, (1, 1), 'SAME', dimension_numbers=dn), g1, b1))
    o = bn(jax.lax.conv_general_dilated(
        h, w2_hwio, (1, 1), 'SAME', dimension_numbers=dn), g2, b2)
    return _leaky_relu(o + ident)


if __name__ == "__main__":
    # ResidualBlock(inc=8, outc=16, scale=1.0): conv_expand present (inc != outc)
    N, Cin, H, W = 2, 8, 16, 16
    Cout = 16
    Cmid = int(Cout * 1.0)

    key = jax.random.PRNGKey(0)
    kx, kwe, kw1, kw2, kg1, kb1, kg2, kb2 = jax.random.split(key, 8)

    # PyTorch-style NCHW input and deterministic synthetic parameters
    x_nchw = jax.random.normal(kx, (N, Cin, H, W), jnp.float32)
    wexp = 0.1 * jax.random.normal(kwe, (Cin, Cout), jnp.float32)        # 1x1 conv, no bias
    w1 = 0.1 * jax.random.normal(kw1, (3, 3, Cin, Cmid), jnp.float32)    # HWIO
    w2 = 0.1 * jax.random.normal(kw2, (3, 3, Cmid, Cout), jnp.float32)   # HWIO
    g1 = 1.0 + 0.1 * jax.random.normal(kg1, (Cmid,), jnp.float32)
    b1 = 0.1 * jax.random.normal(kb1, (Cmid,), jnp.float32)
    g2 = 1.0 + 0.1 * jax.random.normal(kg2, (Cout,), jnp.float32)
    b2 = 0.1 * jax.random.normal(kb2, (Cout,), jnp.float32)

    out = residual_block(x_nchw, wexp, w1, g1, b1, w2, g2, b2)
    out = jax.block_until_ready(out)

    ref = reference(x_nchw, wexp, w1, g1, b1, w2, g2, b2)
    err = float(jnp.max(jnp.abs(out - ref)))
    assert out.shape == (N, Cout, H, W)
    assert err < 5e-2, f"max abs error too large: {err}"

    print("KERNEL_OK")
</pallas_src>

<mosaic_0001>
module attributes {stable_mosaic.version = 11 : i64} {
  func.func @_conv1_ident_kernel(%arg0: i32, %arg1: memref<1x8x256xf32, #tpu.memory_space<vmem>>, %arg2: memref<32x72xbf16, #tpu.memory_space<vmem>>, %arg3: memref<2x256xf32, #tpu.memory_space<vmem>>, %arg4: memref<1x16x256xf32, #tpu.memory_space<vmem>>, %arg5: memref<1x16x256xf32, #tpu.memory_space<vmem>>, %arg6: memref<1x16x1xf32, #tpu.memory_space<vmem>>, %arg7: memref<1x16x1xf32, #tpu.memory_space<vmem>>) attributes {dimension_semantics = [#tpu.dimension_semantics<parallel>], iteration_bounds = array<i64: 2>, scalar_prefetch = 0 : i64, scratch_operands = 0 : i64, tpu.core_type = #tpu.core_type<tc>, window_params = [{transform_indices = @transform_0, window_bounds = array<i64: 1, 8, 256>}, {pipeline_mode = #tpu.pipeline_mode<synchronous>, transform_indices = @transform_1, window_bounds = array<i64: 32, 72>}, {pipeline_mode = #tpu.pipeline_mode<synchronous>, transform_indices = @transform_2, window_bounds = array<i64: 2, 256>}, {transform_indices = @transform_3, window_bounds = array<i64: 1, 16, 256>}, {transform_indices = @transform_4, window_bounds = array<i64: 1, 16, 256>}, {transform_indices = @transform_5, window_bounds = array<i64: 1, 16, 1>}, {transform_indices = @transform_6, window_bounds = array<i64: 1, 16, 1>}]} {
    %c0 = arith.constant 0 : index
    %c0_0 = arith.constant 0 : index
    %c0_1 = arith.constant 0 : index
    %0 = vector.load %arg1[%c0, %c0_0, %c0_1] : memref<1x8x256xf32, #tpu.memory_space<vmem>>, vector<1x8x256xf32>
    %1 = vector.shape_cast %0 : vector<1x8x256xf32> to vector<8x256xf32>
    %c0_2 = arith.constant 0 : index
    %c0_3 = arith.constant 0 : index
    %2 = vector.load %arg3[%c0_2, %c0_3] : memref<2x256xf32, #tpu.memory_space<vmem>>, vector<1x256xf32>
    %c1 = arith.constant 1 : index
    %c0_4 = arith.constant 0 : index
    %3 = vector.load %arg3[%c1, %c0_4] : memref<2x256xf32, #tpu.memory_space<vmem>>, vector<1x256xf32>
    %cst = arith.constant 0.000000e+00 : f32
    %4 = vector.broadcast %cst : f32 to vector<8x128xf32>
    %5 = tpu.concatenate %4, %1, %4 in 1 : vector<8x128xf32>, vector<8x256xf32>, vector<8x128xf32> -> vector<8x512xf32>
    %6 = vector.extract_strided_slice %5 {offsets = [0, 111], sizes = [8, 256], strides = [1, 1]} : vector<8x512xf32> to vector<8x256xf32>
    %7 = vector.broadcast %2 : vector<1x256xf32> to vector<8x256xf32>
    %8 = arith.mulf %6, %7 : vector<8x256xf32>
    %9 = vector.extract_strided_slice %5 {offsets = [0, 112], sizes = [8, 256], strides = [1, 1]} : vector<8x512xf32> to vector<8x256xf32>
    %10 = vector.extract_strided_slice %5 {offsets = [0, 113], sizes = [8, 256], strides = [1, 1]} : vector<8x512xf32> to vector<8x256xf32>
    %11 = vector.broadcast %3 : vector<1x256xf32> to vector<8x256xf32>
    %12 = arith.mulf %10, %11 : vector<8x256xf32>
    %13 = vector.extract_strided_slice %5 {offsets = [0, 127], sizes = [8, 256], strides = [1, 1]} : vector<8x512xf32> to vector<8x256xf32>
    %14 = vector.broadcast %2 : vector<1x256xf32> to vector<8x256xf32>
    %15 = arith.mulf %13, %14 : vector<8x256xf32>
    %16 = vector.extract_strided_slice %5 {offsets = [0, 128], sizes = [8, 256], strides = [1, 1]} : vector<8x512xf32> to vector<8x256xf32>
    %17 = vector.extract_strided_slice %5 {offsets = [0, 129], sizes = [8, 256], strides = [1, 1]} : vector<8x512xf32> to vector<8x256xf32>
    %18 = vector.broadcast %3 : vector<1x256xf32> to vector<8x256xf32>
    %19 = arith.mulf %17, %18 : vector<8x256xf32>
    %20 = vector.extract_strided_slice %5 {offsets = [0, 143], sizes = [8, 256], strides = [1, 1]} : vector<8x512xf32> to vector<8x256xf32>
    %21 = vector.broadcast %2 : vector<1x256xf32> to vector<8x256xf32>
    %22 = arith.mulf %20, %21 : vector<8x256xf32>
    %23 = vector.extract_strided_slice %5 {offsets = [0, 144], sizes = [8, 256], strides = [1, 1]} : vector<8x512xf32> to vector<8x256xf32>
    %24 = vector.extract_strided_slice %5 {offsets = [0, 145], sizes = [8, 256], strides = [1, 1]} : vector<8x512xf32> to vector<8x256xf32>
    %25 = vector.broadcast %3 : vector<1x256xf32> to vector<8x256xf32>
    %26 = arith.mulf %24, %25 : vector<8x256xf32>
    %27 = tpu.concatenate %8, %9, %12, %15, %16, %19, %22, %23, %26 in 0 : vector<8x256xf32>, vector<8x256xf32>, vector<8x256xf32>, vector<8x256xf32>, vector<8x256xf32>, vector<8x256xf32>, vector<8x256xf32>, vector<8x256xf32>, vector<8x256xf32> -> vector<72x256xf32>
    %c0_5 = arith.constant 0 : index
    %c0_6 = arith.constant 0 : index
    %28 = vector.load %arg2[%c0_5, %c0_6] : memref<32x72xbf16, #tpu.memory_space<vmem>>, vector<32x72xbf16>
    %29 = arith.truncf %27 : vector<72x256xf32> to vector<72x256xbf16>
    %cst_7 = arith.constant dense<0.000000e+00> : vector<32x256xf32>
    %30 = tpu.matmul %28, %29, %cst_7 {dimension_numbers = #tpu.dot_dimension_numbers<[1], [0], [0], [1], [0, 0, 1, 1], [], []>} : vector<32x72xbf16>, vector<72x256xbf16>, vector<32x256xf32> -> vector<32x256xf32>
    %31 = vector.extract_strided_slice %30 {offsets = [0, 0], sizes = [16, 256], strides = [1, 1]} : vector<32x256xf32> to vector<16x256xf32>
    %c0_8 = arith.constant 0 : index
    %c0_9 = arith.constant 0 : index
    %c0_10 = arith.constant 0 : index
    %32 = vector.load %arg4[%c0_8, %c0_9, %c0_10] : memref<1x16x256xf32, #tpu.memory_space<vmem>>, vector<1x16x256xf32>
    %33 = vector.shape_cast %32 : vector<1x16x256xf32> to vector<16x256xf32>
    %34 = vector.shape_cast %31 : vector<16x256xf32> to vector<1x16x256xf32>
    tpu.vector_store %arg4[%c0_8, %c0_9, %c0_10], %34 {strides = array<i32>} : memref<1x16x256xf32, #tpu.memory_space<vmem>>, vector<1x16x256xf32>,
    %35 = vector.extract_strided_slice %30 {offsets = [16, 0], sizes = [16, 256], strides = [1, 1]} : vector<32x256xf32> to vector<16x256xf32>
    %c0_11 = arith.constant 0 : index
    %c0_12 = arith.constant 0 : index
    %c0_13 = arith.constant 0 : index
    %36 = vector.load %arg5[%c0_11, %c0_12, %c0_13] : memref<1x16x256xf32, #tpu.memory_space<vmem>>, vector<1x16x256xf32>
    %37 = vector.shape_cast %36 : vector<1x16x256xf32> to vector<16x256xf32>
    %38 = vector.shape_cast %35 : vector<16x256xf32> to vector<1x16x256xf32>
    tpu.vector_store %arg5[%c0_11, %c0_12, %c0_13], %38 {strides = array<i32>} : memref<1x16x256xf32, #tpu.memory_space<vmem>>, vector<1x16x256xf32>,
    %cst_14 = arith.constant dense<0.000000e+00> : vector<16xf32>
    %39 = vector.multi_reduction <add>, %31, %cst_14 [1] : vector<16x256xf32> to vector<16xf32>
    %40 = vector.shape_cast %39 : vector<16xf32> to vector<16x1xf32>
    %c0_15 = arith.constant 0 : index
    %c0_16 = arith.constant 0 : index
    %c0_17 = arith.constant 0 : index
    %41 = vector.load %arg6[%c0_15, %c0_16, %c0_17] : memref<1x16x1xf32, #tpu.memory_space<vmem>>, vector<1x16x1xf32>
    %42 = vector.shape_cast %41 : vector<1x16x1xf32> to vector<16x1xf32>
    %43 = vector.shape_cast %40 : vector<16x1xf32> to vector<1x16x1xf32>
    tpu.vector_store %arg6[%c0_15, %c0_16, %c0_17], %43 {strides = array<i32>} : memref<1x16x1xf32, #tpu.memory_space<vmem>>, vector<1x16x1xf32>,
    %44 = arith.mulf %31, %31 : vector<16x256xf32>
    %cst_18 = arith.constant dense<0.000000e+00> : vector<16xf32>
    %45 = vector.multi_reduction <add>, %44, %cst_18 [1] : vector<16x256xf32> to vector<16xf32>
    %46 = vector.shape_cast %45 : vector<16xf32> to vector<16x1xf32>
    %c0_19 = arith.constant 0 : index
    %c0_20 = arith.constant 0 : index
    %c0_21 = arith.constant 0 : index
    %47 = vector.load %arg7[%c0_19, %c0_20, %c0_21] : memref<1x16x1xf32, #tpu.memory_space<vmem>>, vector<1x16x1xf32>
    %48 = vector.shape_cast %47 : vector<1x16x1xf32> to vector<16x1xf32>
    %49 = vector.shape_cast %46 : vector<16x1xf32> to vector<1x16x1xf32>
    tpu.vector_store %arg7[%c0_19, %c0_20, %c0_21], %49 {strides = array<i32>} : memref<1x16x1xf32, #tpu.memory_space<vmem>>, vector<1x16x1xf32>,
    return
  }
  func.func @transform_0(%arg0: i32) -> (i32, i32, i32) {
    %c0_i32 = arith.constant 0 : i32
    %c0_i32_0 = arith.constant 0 : i32
    %c0_i32_1 = arith.constant 0 : i32
    return %arg0, %c0_i32, %c0_i32_0 : i32, i32, i32
  }
  func.func @transform_1(%arg0: i32) -> (i32, i32) {
    %c0_i32 = arith.constant 0 : i32
    %c0_i32_0 = arith.constant 0 : i32
    %c0_i32_1 = arith.constant 0 : i32
    return %c0_i32, %c0_i32_0 : i32, i32
  }
  func.func @transform_2(%arg0: i32) -> (i32, i32) {
    %c0_i32 = arith.constant 0 : i32
    %c0_i32_0 = arith.constant 0 : i32
    %c0_i32_1 = arith.constant 0 : i32
    return %c0_i32, %c0_i32_0 : i32, i32
  }
  func.func @transform_3(%arg0: i32) -> (i32, i32, i32) {
    %c0_i32 = arith.constant 0 : i32
    %c0_i32_0 = arith.constant 0 : i32
    %c0_i32_1 = arith.constant 0 : i32
    return %arg0, %c0_i32, %c0_i32_0 : i32, i32, i32
  }
  func.func @transform_4(%arg0: i32) -> (i32, i32, i32) {
    %c0_i32 = arith.constant 0 : i32
    %c0_i32_0 = arith.constant 0 : i32
    %c0_i32_1 = arith.constant 0 : i32
    return %arg0, %c0_i32, %c0_i32_0 : i32, i32, i32
  }
  func.func @transform_5(%arg0: i32) -> (i32, i32, i32) {
    %c0_i32 = arith.constant 0 : i32
    %c0_i32_0 = arith.constant 0 : i32
    %c0_i32_1 = arith.constant 0 : i32
    return %arg0, %c0_i32, %c0_i32_0 : i32, i32, i32
  }
  func.func @transform_6(%arg0: i32) -> (i32, i32, i32) {
    %c0_i32 = arith.constant 0 : i32
    %c0_i32_0 = arith.constant 0 : i32
    %c0_i32_1 = arith.constant 0 : i32
    return %arg0, %c0_i32, %c0_i32_0 : i32, i32, i32
  }
}

module attributes {stable_mosaic.version = 11 : i64} {
  func.func @_bn1_conv2_kernel(%arg0: i32, %arg1: memref<1x16x256xf32, #tpu.memory_space<vmem>>, %arg2: memref<16x1xf32, #tpu.memory_space<vmem>>, %arg3: memref<16x1xf32, #tpu.memory_space<vmem>>, %arg4: memref<16x144xbf16, #tpu.memory_space<vmem>>, %arg5: memref<2x256xf32, #tpu.memory_space<vmem>>, %arg6: memref<1x16x256xf32, #tpu.memory_space<vmem>>, %arg7: memref<1x16x1xf32, #tpu.memory_space<vmem>>, %arg8: memref<1x16x1xf32, #tpu.memory_space<vmem>>) attributes {dimension_semantics = [#tpu.dimension_semantics<parallel>], iteration_bounds = array<i64: 2>, scalar_prefetch = 0 : i64, scratch_operands = 0 : i64, tpu.core_type = #tpu.core_type<tc>, window_params = [{transform_indices = @transform_0, window_bounds = array<i64: 1, 16, 256>}, {pipeline_mode = #tpu.pipeline_mode<synchronous>, transform_indices = @transform_1, window_bounds = array<i64: 16, 1>}, {pipeline_mode = #tpu.pipeline_mode<synchronous>, transform_indices = @transform_2, window_bounds = array<i64: 16, 1>}, {pipeline_mode = #tpu.pipeline_mode<synchronous>, transform_indices = @transform_3, window_bounds = array<i64: 16, 144>}, {pipeline_mode = #tpu.pipeline_mode<synchronous>, transform_indices = @transform_4, window_bounds = array<i64: 2, 256>}, {transform_indices = @transform_5, window_bounds = array<i64: 1, 16, 256>}, {transform_indices = @transform_6, window_bounds = array<i64: 1, 16, 1>}, {transform_indices = @transform_7, window_bounds = array<i64: 1, 16, 1>}]} {
    %c0 = arith.constant 0 : index
    %c0_0 = arith.constant 0 : index
    %c0_1 = arith.constant 0 : index
    %0 = vector.load %arg1[%c0, %c0_0, %c0_1] : memref<1x16x256xf32, #tpu.memory_space<vmem>>, vector<1x16x256xf32>
    %1 = vector.shape_cast %0 : vector<1x16x256xf32> to vector<16x256xf32>
    %c0_2 = arith.constant 0 : index
    %c0_3 = arith.constant 0 : index
    %2 = vector.load %arg2[%c0_2, %c0_3] : memref<16x1xf32, #tpu.memory_space<vmem>>, vector<16x1xf32>
    %3 = vector.broadcast %2 : vector<16x1xf32> to vector<16x256xf32>
    %4 = arith.mulf %1, %3 : vector<16x256xf32>
    %c0_4 = arith.constant 0 : index
    %c0_5 = arith.constant 0 : index
    %5 = vector.load %arg3[%c0_4, %c0_5] : memref<16x1xf32, #tpu.memory_space<vmem>>, vector<16x1xf32>
    %6 = vector.broadcast %5 : vector<16x1xf32> to vector<16x256xf32>
    %7 = arith.addf %4, %6 : vector<16x256xf32>
    %cst = arith.constant 0.000000e+00 : f32
    %8 = vector.broadcast %cst : f32 to vector<16x256xf32>
    %9 = arith.cmpf oge, %7, %8 : vector<16x256xf32>
    %cst_6 = arith.constant 2.000000e-01 : f32
    %10 = vector.broadcast %cst_6 : f32 to vector<16x256xf32>
    %11 = arith.mulf %10, %7 : vector<16x256xf32>
    %12 = arith.select %9, %7, %11 : vector<16x256xi1>, vector<16x256xf32>
    %c0_7 = arith.constant 0 : index
    %c0_8 = arith.constant 0 : index
    %13 = vector.load %arg5[%c0_7, %c0_8] : memref<2x256xf32, #tpu.memory_space<vmem>>, vector<1x256xf32>
    %c1 = arith.constant 1 : index
    %c0_9 = arith.constant 0 : index
    %14 = vector.load %arg5[%c1, %c0_9] : memref<2x256xf32, #tpu.memory_space<vmem>>, vector<1x256xf32>
    %cst_10 = arith.constant 0.000000e+00 : f32
    %15 = vector.broadcast %cst_10 : f32 to vector<16x128xf32>
    %16 = tpu.concatenate %15, %12, %15 in 1 : vector<16x128xf32>, vector<16x256xf32>, vector<16x128xf32> -> vector<16x512xf32>
    %17 = vector.extract_strided_slice %16 {offsets = [0, 111], sizes = [16, 256], strides = [1, 1]} : vector<16x512xf32> to vector<16x256xf32>
    %18 = vector.broadcast %13 : vector<1x256xf32> to vector<16x256xf32>
    %19 = arith.mulf %17, %18 : vector<16x256xf32>
    %20 = vector.extract_strided_slice %16 {offsets = [0, 112], sizes = [16, 256], strides = [1, 1]} : vector<16x512xf32> to vector<16x256xf32>
    %21 = vector.extract_strided_slice %16 {offsets = [0, 113], sizes = [16, 256], strides = [1, 1]} : vector<16x512xf32> to vector<16x256xf32>
    %22 = vector.broadcast %14 : vector<1x256xf32> to vector<16x256xf32>
    %23 = arith.mulf %21, %22 : vector<16x256xf32>
    %24 = vector.extract_strided_slice %16 {offsets = [0, 127], sizes = [16, 256], strides = [1, 1]} : vector<16x512xf32> to vector<16x256xf32>
    %25 = vector.broadcast %13 : vector<1x256xf32> to vector<16x256xf32>
    %26 = arith.mulf %24, %25 : vector<16x256xf32>
    %27 = vector.extract_strided_slice %16 {offsets = [0, 128], sizes = [16, 256], strides = [1, 1]} : vector<16x512xf32> to vector<16x256xf32>
    %28 = vector.extract_strided_slice %16 {offsets = [0, 129], sizes = [16, 256], strides = [1, 1]} : vector<16x512xf32> to vector<16x256xf32>
    %29 = vector.broadcast %14 : vector<1x256xf32> to vector<16x256xf32>
    %30 = arith.mulf %28, %29 : vector<16x256xf32>
    %31 = vector.extract_strided_slice %16 {offsets = [0, 143], sizes = [16, 256], strides = [1, 1]} : vector<16x512xf32> to vector<16x256xf32>
    %32 = vector.broadcast %13 : vector<1x256xf32> to vector<16x256xf32>
    %33 = arith.mulf %31, %32 : vector<16x256xf32>
    %34 = vector.extract_strided_slice %16 {offsets = [0, 144], sizes = [16, 256], strides = [1, 1]} : vector<16x512xf32> to vector<16x256xf32>
    %35 = vector.extract_strided_slice %16 {offsets = [0, 145], sizes = [16, 256], strides = [1, 1]} : vector<16x512xf32> to vector<16x256xf32>
    %36 = vector.broadcast %14 : vector<1x256xf32> to vector<16x256xf32>
    %37 = arith.mulf %35, %36 : vector<16x256xf32>
    %38 = tpu.concatenate %19, %20, %23, %26, %27, %30, %33, %34, %37 in 0 : vector<16x256xf32>, vector<16x256xf32>, vector<16x256xf32>, vector<16x256xf32>, vector<16x256xf32>, vector<16x256xf32>, vector<16x256xf32>, vector<16x256xf32>, vector<16x256xf32> -> vector<144x256xf32>
    %c0_11 = arith.constant 0 : index
    %c0_12 = arith.constant 0 : index
    %39 = vector.load %arg4[%c0_11, %c0_12] : memref<16x144xbf16, #tpu.memory_space<vmem>>, vector<16x144xbf16>
    %40 = arith.truncf %38 : vector<144x256xf32> to vector<144x256xbf16>
    %cst_13 = arith.constant dense<0.000000e+00> : vector<16x256xf32>
    %41 = tpu.matmul %39, %40, %cst_13 {dimension_numbers = #tpu.dot_dimension_numbers<[1], [0], [0], [1], [0, 0, 1, 1], [], []>} : vector<16x144xbf16>, vector<144x256xbf16>, vector<16x256xf32> -> vector<16x256xf32>
    %c0_14 = arith.constant 0 : index
    %c0_15 = arith.constant 0 : index
    %c0_16 = arith.constant 0 : index
    %42 = vector.load %arg6[%c0_14, %c0_15, %c0_16] : memref<1x16x256xf32, #tpu.memory_space<vmem>>, vector<1x16x256xf32>
    %43 = vector.shape_cast %42 : vector<1x16x256xf32> to vector<16x256xf32>
    %44 = vector.shape_cast %41 : vector<16x256xf32> to vector<1x16x256xf32>
    tpu.vector_store %arg6[%c0_14, %c0_15, %c0_16], %44 {strides = array<i32>} : memref<1x16x256xf32, #tpu.memory_space<vmem>>, vector<1x16x256xf32>,
    %cst_17 = arith.constant dense<0.000000e+00> : vector<16xf32>
    %45 = vector.multi_reduction <add>, %41, %cst_17 [1] : vector<16x256xf32> to vector<16xf32>
    %46 = vector.shape_cast %45 : vector<16xf32> to vector<16x1xf32>
    %c0_18 = arith.constant 0 : index
    %c0_19 = arith.constant 0 : index
    %c0_20 = arith.constant 0 : index
    %47 = vector.load %arg7[%c0_18, %c0_19, %c0_20] : memref<1x16x1xf32, #tpu.memory_space<vmem>>, vector<1x16x1xf32>
    %48 = vector.shape_cast %47 : vector<1x16x1xf32> to vector<16x1xf32>
    %49 = vector.shape_cast %46 : vector<16x1xf32> to vector<1x16x1xf32>
    tpu.vector_store %arg7[%c0_18, %c0_19, %c0_20], %49 {strides = array<i32>} : memref<1x16x1xf32, #tpu.memory_space<vmem>>, vector<1x16x1xf32>,
    %50 = arith.mulf %41, %41 : vector<16x256xf32>
    %cst_21 = arith.constant dense<0.000000e+00> : vector<16xf32>
    %51 = vector.multi_reduction <add>, %50, %cst_21 [1] : vector<16x256xf32> to vector<16xf32>
    %52 = vector.shape_cast %51 : vector<16xf32> to vector<16x1xf32>
    %c0_22 = arith.constant 0 : index
    %c0_23 = arith.constant 0 : index
    %c0_24 = arith.constant 0 : index
    %53 = vector.load %arg8[%c0_22, %c0_23, %c0_24] : memref<1x16x1xf32, #tpu.memory_space<vmem>>, vector<1x16x1xf32>
    %54 = vector.shape_cast %53 : vector<1x16x1xf32> to vector<16x1xf32>
    %55 = vector.shape_cast %52 : vector<16x1xf32> to vector<1x16x1xf32>
    tpu.vector_store %arg8[%c0_22, %c0_23, %c0_24], %55 {strides = array<i32>} : memref<1x16x1xf32, #tpu.memory_space<vmem>>, vector<1x16x1xf32>,
    return
  }
  func.func @transform_0(%arg0: i32) -> (i32, i32, i32) {
    %c0_i32 = arith.constant 0 : i32
    %c0_i32_0 = arith.constant 0 : i32
    %c0_i32_1 = arith.constant 0 : i32
    return %arg0, %c0_i32, %c0_i32_0 : i32, i32, i32
  }
  func.func @transform_1(%arg0: i32) -> (i32, i32) {
    %c0_i32 = arith.constant 0 : i32
    %c0_i32_0 = arith.constant 0 : i32
    %c0_i32_1 = arith.constant 0 : i32
    return %c0_i32, %c0_i32_0 : i32, i32
  }
  func.func @transform_2(%arg0: i32) -> (i32, i32) {
    %c0_i32 = arith.constant 0 : i32
    %c0_i32_0 = arith.constant 0 : i32
    %c0_i32_1 = arith.constant 0 : i32
    return %c0_i32, %c0_i32_0 : i32, i32
  }
  func.func @transform_3(%arg0: i32) -> (i32, i32) {
    %c0_i32 = arith.constant 0 : i32
    %c0_i32_0 = arith.constant 0 : i32
    %c0_i32_1 = arith.constant 0 : i32
    return %c0_i32, %c0_i32_0 : i32, i32
  }
  func.func @transform_4(%arg0: i32) -> (i32, i32) {
    %c0_i32 = arith.constant 0 : i32
    %c0_i32_0 = arith.constant 0 : i32
    %c0_i32_1 = arith.constant 0 : i32
    return %c0_i32, %c0_i32_0 : i32, i32
  }
  func.func @transform_5(%arg0: i32) -> (i32, i32, i32) {
    %c0_i32 = arith.constant 0 : i32
    %c0_i32_0 = arith.constant 0 : i32
    %c0_i32_1 = arith.constant 0 : i32
    return %arg0, %c0_i32, %c0_i32_0 : i32, i32, i32
  }
  func.func @transform_6(%arg0: i32) -> (i32, i32, i32) {
    %c0_i32 = arith.constant 0 : i32
    %c0_i32_0 = arith.constant 0 : i32
    %c0_i32_1 = arith.constant 0 : i32
    return %arg0, %c0_i32, %c0_i32_0 : i32, i32, i32
  }
  func.func @transform_7(%arg0: i32) -> (i32, i32, i32) {
    %c0_i32 = arith.constant 0 : i32
    %c0_i32_0 = arith.constant 0 : i32
    %c0_i32_1 = arith.constant 0 : i32
    return %arg0, %c0_i32, %c0_i32_0 : i32, i32, i32
  }
}

module attributes {stable_mosaic.version = 11 : i64} {
  func.func @_bn2_add_kernel(%arg0: i32, %arg1: memref<1x16x256xf32, #tpu.memory_space<vmem>>, %arg2: memref<1x16x256xf32, #tpu.memory_space<vmem>>, %arg3: memref<16x1xf32, #tpu.memory_space<vmem>>, %arg4: memref<16x1xf32, #tpu.memory_space<vmem>>, %arg5: memref<1x16x256xf32, #tpu.memory_space<vmem>>) attributes {dimension_semantics = [#tpu.dimension_semantics<parallel>], iteration_bounds = array<i64: 2>, scalar_prefetch = 0 : i64, scratch_operands = 0 : i64, tpu.core_type = #tpu.core_type<tc>, window_params = [{transform_indices = @transform_0, window_bounds = array<i64: 1, 16, 256>}, {transform_indices = @transform_1, window_bounds = array<i64: 1, 16, 256>}, {pipeline_mode = #tpu.pipeline_mode<synchronous>, transform_indices = @transform_2, window_bounds = array<i64: 16, 1>}, {pipeline_mode = #tpu.pipeline_mode<synchronous>, transform_indices = @transform_3, window_bounds = array<i64: 16, 1>}, {transform_indices = @transform_4, window_bounds = array<i64: 1, 16, 256>}]} {
    %c0 = arith.constant 0 : index
    %c0_0 = arith.constant 0 : index
    %c0_1 = arith.constant 0 : index
    %0 = vector.load %arg1[%c0, %c0_0, %c0_1] : memref<1x16x256xf32, #tpu.memory_space<vmem>>, vector<1x16x256xf32>
    %1 = vector.shape_cast %0 : vector<1x16x256xf32> to vector<16x256xf32>
    %c0_2 = arith.constant 0 : index
    %c0_3 = arith.constant 0 : index
    %2 = vector.load %arg3[%c0_2, %c0_3] : memref<16x1xf32, #tpu.memory_space<vmem>>, vector<16x1xf32>
    %3 = vector.broadcast %2 : vector<16x1xf32> to vector<16x256xf32>
    %4 = arith.mulf %1, %3 : vector<16x256xf32>
    %c0_4 = arith.constant 0 : index
    %c0_5 = arith.constant 0 : index
    %5 = vector.load %arg4[%c0_4, %c0_5] : memref<16x1xf32, #tpu.memory_space<vmem>>, vector<16x1xf32>
    %6 = vector.broadcast %5 : vector<16x1xf32> to vector<16x256xf32>
    %7 = arith.addf %4, %6 : vector<16x256xf32>
    %c0_6 = arith.constant 0 : index
    %c0_7 = arith.constant 0 : index
    %c0_8 = arith.constant 0 : index
    %8 = vector.load %arg2[%c0_6, %c0_7, %c0_8] : memref<1x16x256xf32, #tpu.memory_space<vmem>>, vector<1x16x256xf32>
    %9 = vector.shape_cast %8 : vector<1x16x256xf32> to vector<16x256xf32>
    %10 = arith.addf %7, %9 : vector<16x256xf32>
    %cst = arith.constant 0.000000e+00 : f32
    %11 = vector.broadcast %cst : f32 to vector<16x256xf32>
    %12 = arith.cmpf oge, %10, %11 : vector<16x256xf32>
    %cst_9 = arith.constant 2.000000e-01 : f32
    %13 = vector.broadcast %cst_9 : f32 to vector<16x256xf32>
    %14 = arith.mulf %13, %10 : vector<16x256xf32>
    %15 = arith.select %12, %10, %14 : vector<16x256xi1>, vector<16x256xf32>
    %c0_10 = arith.constant 0 : index
    %c0_11 = arith.constant 0 : index
    %c0_12 = arith.constant 0 : index
    %16 = vector.load %arg5[%c0_10, %c0_11, %c0_12] : memref<1x16x256xf32, #tpu.memory_space<vmem>>, vector<1x16x256xf32>
    %17 = vector.shape_cast %16 : vector<1x16x256xf32> to vector<16x256xf32>
    %18 = vector.shape_cast %15 : vector<16x256xf32> to vector<1x16x256xf32>
    tpu.vector_store %arg5[%c0_10, %c0_11, %c0_12], %18 {strides = array<i32>} : memref<1x16x256xf32, #tpu.memory_space<vmem>>, vector<1x16x256xf32>,
    return
  }
  func.func @transform_0(%arg0: i32) -> (i32, i32, i32) {
    %c0_i32 = arith.constant 0 : i32
    %c0_i32_0 = arith.constant 0 : i32
    %c0_i32_1 = arith.constant 0 : i32
    return %arg0, %c0_i32, %c0_i32_0 : i32, i32, i32
  }
  func.func @transform_1(%arg0: i32) -> (i32, i32, i32) {
    %c0_i32 = arith.constant 0 : i32
    %c0_i32_0 = arith.constant 0 : i32
    %c0_i32_1 = arith.constant 0 : i32
    return %arg0, %c0_i32, %c0_i32_0 : i32, i32, i32
  }
  func.func @transform_2(%arg0: i32) -> (i32, i32) {
    %c0_i32 = arith.constant 0 : i32
    %c0_i32_0 = arith.constant 0 : i32
    %c0_i32_1 = arith.constant 0 : i32
    return %c0_i32, %c0_i32_0 : i32, i32
  }
  func.func @transform_3(%arg0: i32) -> (i32, i32) {
    %c0_i32 = arith.constant 0 : i32
    %c0_i32_0 = arith.constant 0 : i32
    %c0_i32_1 = arith.constant 0 : i32
    return %c0_i32, %c0_i32_0 : i32, i32
  }
  func.func @transform_4(%arg0: i32) -> (i32, i32, i32) {
    %c0_i32 = arith.constant 0 : i32
    %c0_i32_0 = arith.constant 0 : i32
    %c0_i32_1 = arith.constant 0 : i32
    return %arg0, %c0_i32, %c0_i32_0 : i32, i32, i32
  }
}

</mosaic_0001>

<llo_original>
// kernel: residual_block.4
$region0: #{residual_block.4}
  #allocation0 [shape = 'u32[]', space=smem, size = 0x4, offset = 0x4, fixed_abs, tag = 'smem constant byte address 0x4 - core index']
  #allocation1 [shape = 'u32[144,128]{1,0:T(1,128)}', space=vmem, size = 0x12000, scoped, tag = 'internal scratch']
  %s0 = inlined_call_operand.vmem [shape: f32[2,16,256], index: 0, kind: input, shape index: {}]
  %s1 = inlined_call_operand.vmem [shape: f32[16,1], index: 1, kind: input, shape index: {}]
  %s2 = inlined_call_operand.vmem [shape: f32[16,1], index: 2, kind: input, shape index: {}]
  %s3 = inlined_call_operand.vmem [shape: bf16[16,144], index: 3, kind: input, shape index: {}]
  %s4 = inlined_call_operand.vmem [shape: f32[2,256], index: 4, kind: input, shape index: {}]
  %s5 = inlined_call_operand.vmem [shape: f32[2,16,256], index: 5, kind: output, shape index: {0}]
  %s6 = inlined_call_operand.vmem [shape: f32[2,16,1], index: 6, kind: output, shape index: {1}]
  %s7 = inlined_call_operand.vmem [shape: f32[2,16,1], index: 7, kind: output, shape index: {2}]
  %8 = xla_tuple %s5, %s6, %s7
  %s9 = sld [smem:[#allocation0]]
  $region69: #{residual_block.4} parent=0
    _
  %s11 = ssub.s32 1, %s9
  %s12 = scalar_select 0, %s11, %s9
  loop: start=0, step=1, limit=4
  $region2: #{residual_block.4} parent=0 // loop_pre_header
    _
  $region3: #{residual_block.4} parent=0 // loop_header
    %s14 = sphi 0, %s18
    %p15 = scmp.ge.s32.totalorder %s14, 4
    %s24 = sphi 0, %s26
    %s27 = sphi 0, %s24
    %s28 = sphi 0, %s27
    %s44 = sphi 0, %s28
    %s48 = sphi 0, %s48
    %s50 = sphi 0, %s48
    %s51 = sphi 0, %s50
    %s65 = sphi 0, %s51
    %s69 = sphi 0, %s69
    %s71 = sphi 0, %s69
    %s72 = sphi 0, %s71
    %s86 = sphi 0, %s72
    %s90 = sphi 0, %s90
    %s92 = sphi 0, %s90
    %s93 = sphi 0, %s92
    %s107 = sphi 0, %s93
    %s111 = sphi 0, %s111
    %s113 = sphi 0, %s111
    %s114 = sphi 0, %s113
    %s128 = sphi 0, %s114
    %s134 = sphi 0, %s136
    %s137 = sphi 0, %s134
    %s138 = sphi 0, %s137
    %s154 = sphi 0, %s138
    %s160 = sphi 0, %s162
    %s163 = sphi 0, %s160
    %s164 = sphi 0, %s163
    %s180 = sphi 0, %s164
    %s186 = sphi 0, %s188
    %s189 = sphi 0, %s186
    %s190 = sphi 0, %s189
    %s206 = sphi 0, %s190
  $region4: #{residual_block.4} parent=0 // loop_header_branch
    %17 = sbr.rel (%p15) target = $region8
  $region5: #{residual_block.4} parent=0 // loop_body
    %s19 = ssub.s32 %s14, 1
    %s20 = ssub.s32 %s14, 2
    %s21 = sadd.s32 %s14, 1
    %s22 = ssub.s32 %s14, %s21
    %p23 = scmp.eq.s32.totalorder %s22, 0
    %s25 = sadd.s32 %s24, 1
    %s26 = scalar_select %p23, %s24, %s25
    %p29 = pneg %p23
    %p30 = scmp.eq.s32.totalorder %s14, 1
    %p31 = por %p29, %p30
    %p32 = scmp.ne.s32.totalorder %s24, %s27
    %p33 = scmp.eq.s32.totalorder %s14, 0
    %p34 = por %p32, %p33
    %p35 = scmp.ne.s32.totalorder %s24, %s27
    %p36 = scmp.eq.s32.totalorder %s19, 1
    %p37 = por %p35, %p36
    %p38 = scmp.ne.s32.totalorder %s27, %s28
    %p39 = scmp.eq.s32.totalorder %s19, 0
    %p40 = por %p38, %p39
    %p41 = scmp.ne.s32.totalorder %s27, %s28
    %p42 = scmp.eq.s32.totalorder %s20, 1
    %p43 = por %p41, %p42
    %p45 = scmp.ne.s32.totalorder %s28, %s44
    %p46 = scmp.eq.s32.totalorder %s20, 0
    %p47 = por %p45, %p46
    %s49 = sadd.s32 %s48, 1
    %p52 = scmp.eq.s32.totalorder %s14, 1
    %p53 = scmp.ne.s32.totalorder %s48, %s50
    %p54 = scmp.eq.s32.totalorder %s14, 0
    %p55 = por %p53, %p54
    %p56 = scmp.ne.s32.totalorder %s48, %s50
    %p57 = scmp.eq.s32.totalorder %s19, 1
    %p58 = por %p56, %p57
    %p59 = scmp.ne.s32.totalorder %s50, %s51
    %p60 = scmp.eq.s32.totalorder %s19, 0
    %p61 = por %p59, %p60
    %p62 = scmp.ne.s32.totalorder %s50, %s51
    %p63 = scmp.eq.s32.totalorder %s20, 1
    %p64 = por %p62, %p63
    %p66 = scmp.ne.s32.totalorder %s51, %s65
    %p67 = scmp.eq.s32.totalorder %s20, 0
    %p68 = por %p66, %p67
    %s70 = sadd.s32 %s69, 1
    %p73 = scmp.eq.s32.totalorder %s14, 1
    %p74 = scmp.ne.s32.totalorder %s69, %s71
    %p75 = scmp.eq.s32.totalorder %s14, 0
    %p76 = por %p74, %p75
    %p77 = scmp.ne.s32.totalorder %s69, %s71
    %p78 = scmp.eq.s32.totalorder %s19, 1
    %p79 = por %p77, %p78
    %p80 = scmp.ne.s32.totalorder %s71, %s72
    %p81 = scmp.eq.s32.totalorder %s19, 0
    %p82 = por %p80, %p81
    %p83 = scmp.ne.s32.totalorder %s71, %s72
    %p84 = scmp.eq.s32.totalorder %s20, 1
    %p85 = por %p83, %p84
    %p87 = scmp.ne.s32.totalorder %s72, %s86
    %p88 = scmp.eq.s32.totalorder %s20, 0
    %p89 = por %p87, %p88
    %s91 = sadd.s32 %s90, 1
    %p94 = scmp.eq.s32.totalorder %s14, 1
    %p95 = scmp.ne.s32.totalorder %s90, %s92
    %p96 = scmp.eq.s32.totalorder %s14, 0
    %p97 = por %p95, %p96
    %p98 = scmp.ne.s32.totalorder %s90, %s92
    %p99 = scmp.eq.s32.totalorder %s19, 1
    %p100 = por %p98, %p99
    %p101 = scmp.ne.s32.totalorder %s92, %s93
    %p102 = scmp.eq.s32.totalorder %s19, 0
    %p103 = por %p101, %p102
    %p104 = scmp.ne.s32.totalorder %s92, %s93
    %p105 = scmp.eq.s32.totalorder %s20, 1
    %p106 = por %p104, %p105
    %p108 = scmp.ne.s32.totalorder %s93, %s107
    %p109 = scmp.eq.s32.totalorder %s20, 0
    %p110 = por %p108, %p109
    %s112 = sadd.s32 %s111, 1
    %p115 = scmp.eq.s32.totalorder %s14, 1
    %p116 = scmp.ne.s32.totalorder %s111, %s113
    %p117 = scmp.eq.s32.totalorder %s14, 0
    %p118 = por %p116, %p117
    %p119 = scmp.ne.s32.totalorder %s111, %s113
    %p120 = scmp.eq.s32.totalorder %s19, 1
    %p121 = por %p119, %p120
    %p122 = scmp.ne.s32.totalorder %s113, %s114
    %p123 = scmp.eq.s32.totalorder %s19, 0
    %p124 = por %p122, %p123
    %p125 = scmp.ne.s32.totalorder %s113, %s114
    %p126 = scmp.eq.s32.totalorder %s20, 1
    %p127 = por %p125, %p126
    %p129 = scmp.ne.s32.totalorder %s114, %s128
    %p130 = scmp.eq.s32.totalorder %s20, 0
    %p131 = por %p129, %p130
    %s132 = ssub.s32 %s14, %s21
    %p133 = scmp.eq.s32.totalorder %s132, 0
    %s135 = sadd.s32 %s134, 1
    %s136 = scalar_select %p133, %s134, %s135
    %p139 = pneg %p133
    %p140 = scmp.eq.s32.totalorder %s14, 1
    %p141 = por %p139, %p140
    %p142 = scmp.ne.s32.totalorder %s134, %s137
    %p143 = scmp.eq.s32.totalorder %s14, 0
    %p144 = por %p142, %p143
    %p145 = scmp.ne.s32.totalorder %s134, %s137
    %p146 = scmp.eq.s32.totalorder %s19, 1
    %p147 = por %p145, %p146
    %p148 = scmp.ne.s32.totalorder %s137, %s138
    %p149 = scmp.eq.s32.totalorder %s19, 0
    %p150 = por %p148, %p149
    %p151 = scmp.ne.s32.totalorder %s137, %s138
    %p152 = scmp.eq.s32.totalorder %s20, 1
    %p153 = por %p151, %p152
    %p155 = scmp.ne.s32.totalorder %s138, %s154
    %p156 = scmp.eq.s32.totalorder %s20, 0
    %p157 = por %p155, %p156
    %s158 = ssub.s32 %s14, %s21
    %p159 = scmp.eq.s32.totalorder %s158, 0
    %s161 = sadd.s32 %s160, 1
    %s162 = scalar_select %p159, %s160, %s161
    %p165 = pneg %p159
    %p166 = scmp.eq.s32.totalorder %s14, 1
    %p167 = por %p165, %p166
    %p168 = scmp.ne.s32.totalorder %s160, %s163
    %p169 = scmp.eq.s32.totalorder %s14, 0
    %p170 = por %p168, %p169
    %p171 = scmp.ne.s32.totalorder %s160, %s163
    %p172 = scmp.eq.s32.totalorder %s19, 1
    %p173 = por %p171, %p172
    %p174 = scmp.ne.s32.totalorder %s163, %s164
    %p175 = scmp.eq.s32.totalorder %s19, 0
    %p176 = por %p174, %p175
    %p177 = scmp.ne.s32.totalorder %s163, %s164
    %p178 = scmp.eq.s32.totalorder %s20, 1
    %p179 = por %p177, %p178
    %p181 = scmp.ne.s32.totalorder %s164, %s180
    %p182 = scmp.eq.s32.totalorder %s20, 0
    %p183 = por %p181, %p182
    %s184 = ssub.s32 %s14, %s21
    %p185 = scmp.eq.s32.totalorder %s184, 0
    %s187 = sadd.s32 %s186, 1
    %s188 = scalar_select %p185, %s186, %s187
    %p191 = pneg %p185
    %p192 = scmp.eq.s32.totalorder %s14, 1
    %p193 = por %p191, %p192
    %p194 = scmp.ne.s32.totalorder %s186, %s189
    %p195 = scmp.eq.s32.totalorder %s14, 0
    %p196 = por %p194, %p195
    %p197 = scmp.ne.s32.totalorder %s186, %s189
    %p198 = scmp.eq.s32.totalorder %s19, 1
    %p199 = por %p197, %p198
    %p200 = scmp.ne.s32.totalorder %s189, %s190
    %p201 = scmp.eq.s32.totalorder %s19, 0
    %p202 = por %p200, %p201
    %p203 = scmp.ne.s32.totalorder %s189, %s190
    %p204 = scmp.eq.s32.totalorder %s20, 1
    %p205 = por %p203, %p204
    %p207 = scmp.ne.s32.totalorder %s190, %s206
    %p208 = scmp.eq.s32.totalorder %s20, 0
    %p209 = por %p207, %p208
    %p210 = scmp.le.s32.totalorder 1, %s14
    %p211 = scmp.lt.s32.totalorder %s14, 3
    %p212 = pnand %p210, %p211
    %p213 = pneg %p212
    // Predicated region
    $region9: #{residual_block.4} parent=5 // pred_check
      _
    $region10: #{residual_block.4} parent=5 // pred_check_branch
      %215 = sbr.rel (%p212) target = $region12
    $region11: #{residual_block.4} parent=5 // pred_region
      %s216 = ssub.s32 %s14, 1
      // Predicated region
      $region13: #{residual_block.4} parent=11 // pred_check
        %p217 = pneg %p61
      $region14: #{residual_block.4} parent=11 // pred_check_branch
        %219 = sbr.rel (%p217) target = $region16
      $region15: #{residual_block.4} parent=11 // pred_region
        _
      $region16: #{residual_block.4} parent=11 // pred_fallthru
        _
      // Predicated region
      $region17: #{residual_block.4} parent=11 // pred_check
        %p220 = pneg %p82
      $region18: #{residual_block.4} parent=11 // pred_check_branch
        %222 = sbr.rel (%p220) target = $region20
      $region19: #{residual_block.4} parent=11 // pred_region
        _
      $region20: #{residual_block.4} parent=11 // pred_fallthru
        _
      // Predicated region
      $region21: #{residual_block.4} parent=11 // pred_check
        %p223 = pneg %p103
      $region22: #{residual_block.4} parent=11 // pred_check_branch
        %225 = sbr.rel (%p223) target = $region24
      $region23: #{residual_block.4} parent=11 // pred_region
        _
      $region24: #{residual_block.4} parent=11 // pred_fallthru
        _
      // Predicated region
      $region25: #{residual_block.4} parent=11 // pred_check
        %p226 = pneg %p124
      $region26: #{residual_block.4} parent=11 // pred_check_branch
        %228 = sbr.rel (%p226) target = $region28
      $region27: #{residual_block.4} parent=11 // pred_region
        _
      $region28: #{residual_block.4} parent=11 // pred_fallthru
        _
    $region12: #{residual_block.4} parent=5 // pred_fallthru
      _
    %p229 = scmp.lt.s32.totalorder %s14, 2
    // Predicated region
    $region29: #{residual_block.4} parent=5 // pred_check
      %p230 = pneg %p229
    $region30: #{residual_block.4} parent=5 // pred_check_branch
      %232 = sbr.rel (%p230) target = $region32
    $region31: #{residual_block.4} parent=5 // pred_region
      // Predicated region
      $region33: #{residual_block.4} parent=31 // pred_check
        %p233 = pneg %p34
      $region34: #{residual_block.4} parent=31 // pred_check_branch
        %235 = sbr.rel (%p233) target = $region36
      $region35: #{residual_block.4} parent=31 // pred_region
        %p236 = scmp.lt.s32.totalorder %s14, 1
        %s237 = scalar_select %p236, %s14, 1
        %s238 = smul.addr %s237, 4
        %s239 = smul.addr %s238, 8
        %s240 = scalar_lea.vmem %s0, %s239
      $region36: #{residual_block.4} parent=31 // pred_fallthru
        _
    $region32: #{residual_block.4} parent=5 // pred_fallthru
      _
    %p241 = scmp.le.s32.totalorder 1, %s14
    %p242 = scmp.lt.s32.totalorder %s14, 3
    %p243 = pnand %p241, %p242
    %p244 = pneg %p243
    // Predicated region
    $region37: #{residual_block.4} parent=5 // pred_check
      _
    $region38: #{residual_block.4} parent=5 // pred_check_branch
      %246 = sbr.rel (%p243) target = $region40
    $region39: #{residual_block.4} parent=5 // pred_region
      %s247 = ssub.s32 %s14, 1
      %p248 = scmp.lt.s32.totalorder %s19, 1
      %s249 = scalar_select %p248, %s19, 1
      %s250 = smul.addr %s249, 4
      %s251 = smul.addr %s250, 8
      %s252 = scalar_lea.vmem %s0, %s251
      %p253 = pneg %p40
      %p254 = pneg %p37
      %p255 = pneg %p61
      %p256 = pneg %p58
      %p257 = pneg %p82
      %p258 = pneg %p79
      %p259 = pneg %p103
      %p260 = pneg %p100
      %p261 = pneg %p124
      %p262 = pneg %p121
      %p263 = pneg %p150
      %p264 = pneg %p147
      %p265 = scmp.lt.s32.totalorder %s19, 1
      %s266 = scalar_select %p265, %s19, 1
      %s267 = smul.addr %s266, 4
      %s268 = smul.addr %s267, 8
      %s269 = scalar_lea.vmem %s5, %s268
      %p270 = pneg %p176
      %p271 = pneg %p173
      %p272 = scmp.lt.s32.totalorder %s19, 1
      %s273 = scalar_select %p272, %s19, 1
      %s274 = smul.addr %s273, 2
      %s275 = smul.addr %s274, 8
      %s276 = scalar_lea.vmem %s6, %s275
      %p277 = pneg %p202
      %p278 = pneg %p199
      %p279 = scmp.lt.s32.totalorder %s19, 1
      %s280 = scalar_select %p279, %s19, 1
      %s281 = smul.addr %s280, 2
      %s282 = smul.addr %s281, 8
      %s283 = scalar_lea.vmem %s7, %s282
      %p284 = scmp.lt.s32.totalorder %s19, 1
      %s285 = scalar_select %p284, %s19, 1
      %s286 = smul.addr %s285, 4
      %s287 = smul.addr %s286, 8
      %s288 = scalar_lea.vmem %s0, %s287
      %p289 = scmp.lt.s32.totalorder %s19, 1
      %s290 = scalar_select %p289, %s19, 1
      %s291 = smul.addr %s290, 4
      %s292 = smul.addr %s291, 8
      %s293 = scalar_lea.vmem %s5, %s292
      %p294 = scmp.lt.s32.totalorder %s19, 1
      %s295 = scalar_select %p294, %s19, 1
      %s296 = smul.addr %s295, 2
      %s297 = smul.addr %s296, 8
      %s298 = scalar_lea.vmem %s6, %s297
      %p299 = scmp.lt.s32.totalorder %s19, 1
      %s300 = scalar_select %p299, %s19, 1
      %s301 = smul.addr %s300, 2
      %s302 = smul.addr %s301, 8
      %s303 = scalar_lea.vmem %s7, %s302
      %v305 = vld [vmem:[%s288] sm:$0xff]
      %v306 = vld [vmem:[%s288 + $0x8] sm:$0xff]
      %v307 = vld [vmem:[%s288 + $0x10] sm:$0xff]
      %v308 = vld [vmem:[%s288 + $0x18] sm:$0xff]
      %v309 = vld [vmem:[%s1] sm:$0xff]
      %v310 = vld [vmem:[%s1 + $0x8] sm:$0xff]
      %312 = vset.pattern.permute.xlu0 0
      %313 = vperm.xlu0 %312, %v309
      %v314 = vpop.permute.xlu0 %313
      %317 = vset.pattern.permute.xlu0 0
      %318 = vperm.xlu0 %317, %v310
      %v319 = vpop.permute.xlu0 %318
      %v321 = vmul.f32 %v305, %v314
      %v322 = vmul.f32 %v306, %v314
      %v323 = vmul.f32 %v307, %v319
      %v324 = vmul.f32 %v308, %v319
      %v325 = vld [vmem:[%s2] sm:$0xff]
      %v326 = vld [vmem:[%s2 + $0x8] sm:$0xff]
      %328 = vset.pattern.permute.xlu0 0
      %329 = vperm.xlu0 %328, %v325
      %v330 = vpop.permute.xlu0 %329
      %333 = vset.pattern.permute.xlu0 0
      %334 = vperm.xlu0 %333, %v326
      %v335 = vpop.permute.xlu0 %334
      %v337 = vadd.f32 %v321, %v330
      %v338 = vadd.f32 %v322, %v330
      %v339 = vadd.f32 %v323, %v335
      %v340 = vadd.f32 %v324, %v335
      %vm341 = vcmp.ge.f32.partialorder %v337, 0.0
      %vm342 = vcmp.ge.f32.partialorder %v338, 0.0
      %vm343 = vcmp.ge.f32.partialorder %v339, 0.0
      %vm344 = vcmp.ge.f32.partialorder %v340, 0.0
      %v345 = vmul.f32 %v337, 0.2
      %v346 = vmul.f32 %v338, 0.2
      %v347 = vmul.f32 %v339, 0.2
      %v348 = vmul.f32 %v340, 0.2
      %v349 = vsel %vm341, %v337, %v345
      %v350 = vsel %vm342, %v338, %v346
      %v351 = vsel %vm343, %v339, %v347
      %v352 = vsel %vm344, %v340, %v348
      %v353 = vld [vmem:[%s4] ss:$2 sm:$0x3]
      %s354 = scalar_lea.vmem %s4, 1
      %v355 = vld [vmem:[%s354] ss:$2 sm:$0x3]
      %v357 = vlaneseq
      %v358 = vshrl.u32 %v357, 7
      %v359 = vsub.s32 0, %v358
      %v360 = vrot.slane %v353, %v359
      %v361 = vlaneseq
      %v362 = vshrl.u32 %v361, 7
      %v363 = vsub.s32 1, %v362
      %v364 = vrot.slane %v353, %v363
      %365 = vrot.lane.b32.xlu0 %v360, 111
      %v366 = vpop.permute.xlu0 %365
      %367 = vrot.lane.b32.xlu0 %v364, 111
      %v368 = vpop.permute.xlu0 %367
      %vm369 = vcmask 908288
      %v370 = vsel %vm369, %v366, %v368
      %v374 = vmul.f32 %v366, 0.0
      %v375 = vmul.f32 %v349, %v370
      %v376 = vmul.f32 %v350, %v368
      %v377 = vmul.f32 %v351, %v370
      %v378 = vmul.f32 %v352, %v368
      %v380 = vlaneseq
      %v381 = vshrl.u32 %v380, 7
      %v382 = vsub.s32 0, %v381
      %v383 = vrot.slane %v355, %v382
      %v384 = vlaneseq
      %v385 = vshrl.u32 %v384, 7
      %v386 = vsub.s32 1, %v385
      %v387 = vrot.slane %v355, %v386
      %388 = vrot.lane.b32.xlu0 %v383, 113
      %v389 = vpop.permute.xlu0 %388
      %390 = vrot.lane.b32.xlu0 %v387, 113
      %v391 = vpop.permute.xlu0 %390
      %vm392 = vcmask 924672
      %v393 = vsel %vm392, %v389, %v391
      %v397 = vmul.f32 %v389, 0.0
      %v398 = vmul.f32 %v349, %v393
      %v399 = vmul.f32 %v350, %v391
      %v400 = vmul.f32 %v351, %v393
      %v401 = vmul.f32 %v352, %v391
      %402 = vrot.lane.b32.xlu0 %v360, 127
      %v403 = vpop.permute.xlu0 %402
      %404 = vrot.lane.b32.xlu0 %v364, 127
      %v405 = vpop.permute.xlu0 %404
      %vm406 = vcmask 1039360
      %v407 = vsel %vm406, %v403, %v405
      %v411 = vmul.f32 %v403, 0.0
      %v412 = vmul.f32 %v349, %v407
      %v413 = vmul.f32 %v350, %v405
      %v414 = vmul.f32 %v351, %v407
      %v415 = vmul.f32 %v352, %v405
      %416 = vrot.lane.b32.xlu0 %v383, 1
      %v417 = vpop.permute.xlu0 %416
      %418 = vrot.lane.b32.xlu0 %v387, 1
      %v419 = vpop.permute.xlu0 %418
      %vm420 = vcmask 7168
      %v421 = vsel %vm420, %v417, %v419
      %v425 = vmul.f32 %v349, %v417
      %v426 = vmul.f32 %v350, %v421
      %v427 = vmul.f32 %v419, 0.0
      %v428 = vmul.f32 %v351, %v417
      %v429 = vmul.f32 %v352, %v421
      %430 = vrot.lane.b32.xlu0 %v360, 15
      %v431 = vpop.permute.xlu0 %430
      %432 = vrot.lane.b32.xlu0 %v364, 15
      %v433 = vpop.permute.xlu0 %432
      %vm434 = vcmask 121856
      %v435 = vsel %vm434, %v431, %v433
      %v439 = vmul.f32 %v349, %v431
      %v440 = vmul.f32 %v350, %v435
      %v441 = vmul.f32 %v433, 0.0
      %v442 = vmul.f32 %v351, %v431
      %v443 = vmul.f32 %v352, %v435
      %444 = vrot.lane.b32.xlu0 %v383, 17
      %v445 = vpop.permute.xlu0 %444
      %446 = vrot.lane.b32.xlu0 %v387, 17
      %v447 = vpop.permute.xlu0 %446
      %vm448 = vcmask 138240
      %v449 = vsel %vm448, %v445, %v447
      %v453 = vmul.f32 %v349, %v445
      %v454 = vmul.f32 %v350, %v449
      %v455 = vmul.f32 %v447, 0.0
      %v456 = vmul.f32 %v351, %v445
      %v457 = vmul.f32 %v352, %v449
      %463 = vrot.lane.b32.xlu0 0.0, 127
      %v464 = vpop.permute.xlu0 %463
      %465 = vrot.lane.b32.xlu0 %v349, 127
      %v466 = vpop.permute.xlu0 %465
      %467 = vrot.lane.b32.xlu0 %v350, 127
      %v468 = vpop.permute.xlu0 %467
      %469 = vrot.lane.b32.xlu0 %v351, 127
      %v470 = vpop.permute.xlu0 %469
      %471 = vrot.lane.b32.xlu0 %v352, 127
      %v472 = vpop.permute.xlu0 %471
      %v473 = vsel %vm406, %v464, %v466
      %v474 = vsel %vm406, %v466, %v468
      %v475 = vsel %vm406, %v464, %v470
      %v476 = vsel %vm406, %v470, %v472
      %488 = vrot.lane.b32.xlu0 %v397, 126
      %v489 = vpop.permute.xlu0 %488
      %490 = vrot.lane.b32.xlu0 %v398, 126
      %v491 = vpop.permute.xlu0 %490
      %492 = vrot.lane.b32.xlu0 %v399, 126
      %v493 = vpop.permute.xlu0 %492
      %494 = vrot.lane.b32.xlu0 %v400, 126
      %v495 = vpop.permute.xlu0 %494
      %496 = vrot.lane.b32.xlu0 %v401, 126
      %v497 = vpop.permute.xlu0 %496
      %vm498 = vcmask 1031168
      %v499 = vsel %vm498, %v489, %v491
      %v500 = vsel %vm498, %v491, %v493
      %v501 = vsel %vm498, %v489, %v495
      %v502 = vsel %vm498, %v495, %v497
      %514 = vrot.lane.b32.xlu0 %v411, 112
      %v515 = vpop.permute.xlu0 %514
      %516 = vrot.lane.b32.xlu0 %v412, 112
      %v517 = vpop.permute.xlu0 %516
      %518 = vrot.lane.b32.xlu0 %v413, 112
      %v519 = vpop.permute.xlu0 %518
      %520 = vrot.lane.b32.xlu0 %v414, 112
      %v521 = vpop.permute.xlu0 %520
      %522 = vrot.lane.b32.xlu0 %v415, 112
      %v523 = vpop.permute.xlu0 %522
      %vm524 = vcmask 916480
      %v525 = vsel %vm524, %v515, %v517
      %v526 = vsel %vm524, %v517, %v519
      %v527 = vsel %vm524, %v515, %v521
      %v528 = vsel %vm524, %v521, %v523
      %535 = vrot.lane.b32.xlu0 %v349, 111
      %v536 = vpop.permute.xlu0 %535
      %537 = vrot.lane.b32.xlu0 %v350, 111
      %v538 = vpop.permute.xlu0 %537
      %539 = vrot.lane.b32.xlu0 %v351, 111
      %v540 = vpop.permute.xlu0 %539
      %541 = vrot.lane.b32.xlu0 %v352, 111
      %v542 = vpop.permute.xlu0 %541
      %v543 = vsel %vm369, %v536, %v538
      %v544 = vsel %vm369, %v540, %v542
      %556 = vrot.lane.b32.xlu0 %v425, 110
      %v557 = vpop.permute.xlu0 %556
      %558 = vrot.lane.b32.xlu0 %v426, 110
      %v559 = vpop.permute.xlu0 %558
      %560 = vrot.lane.b32.xlu0 %v427, 110
      %v561 = vpop.permute.xlu0 %560
      %562 = vrot.lane.b32.xlu0 %v428, 110
      %v563 = vpop.permute.xlu0 %562
      %564 = vrot.lane.b32.xlu0 %v429, 110
      %v565 = vpop.permute.xlu0 %564
      %vm566 = vcmask 900096
      %v567 = vsel %vm566, %v557, %v559
      %v568 = vsel %vm566, %v559, %v561
      %v569 = vsel %vm566, %v563, %v565
      %v570 = vsel %vm566, %v565, %v561
      %582 = vrot.lane.b32.xlu0 %v439, 96
      %v583 = vpop.permute.xlu0 %582
      %584 = vrot.lane.b32.xlu0 %v440, 96
      %v585 = vpop.permute.xlu0 %584
      %586 = vrot.lane.b32.xlu0 %v441, 96
      %v587 = vpop.permute.xlu0 %586
      %588 = vrot.lane.b32.xlu0 %v442, 96
      %v589 = vpop.permute.xlu0 %588
      %590 = vrot.lane.b32.xlu0 %v443, 96
      %v591 = vpop.permute.xlu0 %590
      %vm592 = vcmask 785408
      %v593 = vsel %vm592, %v583, %v585
      %v594 = vsel %vm592, %v585, %v587
      %v595 = vsel %vm592, %v589, %v591
      %v596 = vsel %vm592, %v591, %v587
      %603 = vrot.lane.b32.xlu0 %v349, 95
      %v604 = vpop.permute.xlu0 %603
      %605 = vrot.lane.b32.xlu0 %v350, 95
      %v606 = vpop.permute.xlu0 %605
      %607 = vrot.lane.b32.xlu0 0.0, 95
      %v608 = vpop.permute.xlu0 %607
      %609 = vrot.lane.b32.xlu0 %v351, 95
      %v610 = vpop.permute.xlu0 %609
      %611 = vrot.lane.b32.xlu0 %v352, 95
      %v612 = vpop.permute.xlu0 %611
      %vm613 = vcmask 777216
      %v614 = vsel %vm613, %v604, %v606
      %v615 = vsel %vm613, %v606, %v608
      %v616 = vsel %vm613, %v610, %v612
      %v617 = vsel %vm613, %v612, %v608
      %629 = vrot.lane.b32.xlu0 %v453, 94
      %v630 = vpop.permute.xlu0 %629
      %631 = vrot.lane.b32.xlu0 %v454, 94
      %v632 = vpop.permute.xlu0 %631
      %633 = vrot.lane.b32.xlu0 %v455, 94
      %v634 = vpop.permute.xlu0 %633
      %635 = vrot.lane.b32.xlu0 %v456, 94
      %v636 = vpop.permute.xlu0 %635
      %637 = vrot.lane.b32.xlu0 %v457, 94
      %v638 = vpop.permute.xlu0 %637
      %vm639 = vcmask 769024
      %v640 = vsel %vm639, %v630, %v632
      %v641 = vsel %vm639, %v632, %v634
      %v642 = vsel %vm639, %v636, %v638
      %v643 = vsel %vm639, %v638, %v634
      %v650 = vld [vmem:[%s3] sm:$0xff]
      %v651 = vld [vmem:[%s3 + $0x8] sm:$0xff]
      %v652 = vpack.c.bf16 %v374, %v374
      %v653 = vpack.c.bf16 %v377, %v375
      %v654 = vpack.c.bf16 %v378, %v376
      %v655 = vpack.c.bf16 %v475, %v473
      %v656 = vpack.c.bf16 %v476, %v474
      %v657 = vpack.c.bf16 %v472, %v468
      %v658 = vpack.c.bf16 %v501, %v499
      %v659 = vpack.c.bf16 %v502, %v500
      %v660 = vpack.c.bf16 %v497, %v493
      %v661 = vpack.c.bf16 %v527, %v525
      %v662 = vpack.c.bf16 %v528, %v526
      %v663 = vpack.c.bf16 %v523, %v519
      %v664 = vpack.c.bf16 %v540, %v536
      %v665 = vpack.c.bf16 %v544, %v543
      %v666 = vpack.c.bf16 %v542, %v538
      %v667 = vpack.c.bf16 %v563, %v557
      %v668 = vpack.c.bf16 %v569, %v567
      %v669 = vpack.c.bf16 %v570, %v568
      %v670 = vpack.c.bf16 %v589, %v583
      %v671 = vpack.c.bf16 %v595, %v593
      %v672 = vpack.c.bf16 %v596, %v594
      %v673 = vpack.c.bf16 %v610, %v604
      %v674 = vpack.c.bf16 %v616, %v614
      %v675 = vpack.c.bf16 %v617, %v615
      %v676 = vpack.c.bf16 %v636, %v630
      %v677 = vpack.c.bf16 %v642, %v640
      %v678 = vpack.c.bf16 %v643, %v641
      %v681 = vunpack.c.l.b16 %v650
      %v682 = vunpack.c.h.b16 %v650
      %v683 = vunpack.c.l.b16 %v651
      %v684 = vunpack.c.h.b16 %v651
      %v685 = vpack.c.b16 %v683, %v681
      %v686 = vpack.c.b16 %v684, %v682
      %715 = vrot.lane.b32.xlu0 %v652, 17
      %v716 = vpop.permute.xlu0 %715
      %717 = vrot.lane.b32.xlu0 %v653, 17
      %v718 = vpop.permute.xlu0 %717
      %719 = vrot.lane.b32.xlu0 %v654, 17
      %v720 = vpop.permute.xlu0 %719
      %721 = vrot.lane.b32.xlu0 %v655, 17
      %v722 = vpop.permute.xlu0 %721
      %723 = vrot.lane.b32.xlu0 %v656, 17
      %v724 = vpop.permute.xlu0 %723
      %725 = vrot.lane.b32.xlu0 %v657, 17
      %v726 = vpop.permute.xlu0 %725
      %727 = vrot.lane.b32.xlu0 %v658, 17
      %v728 = vpop.permute.xlu0 %727
      %729 = vrot.lane.b32.xlu0 %v659, 17
      %v730 = vpop.permute.xlu0 %729
      %731 = vrot.lane.b32.xlu0 %v660, 17
      %v732 = vpop.permute.xlu0 %731
      %733 = vrot.lane.b32.xlu0 %v661, 17
      %v734 = vpop.permute.xlu0 %733
      %735 = vrot.lane.b32.xlu0 %v662, 17
      %v736 = vpop.permute.xlu0 %735
      %737 = vrot.lane.b32.xlu0 %v663, 17
      %v738 = vpop.permute.xlu0 %737
      %739 = vrot.lane.b32.xlu0 %v664, 17
      %v740 = vpop.permute.xlu0 %739
      %741 = vrot.lane.b32.xlu0 %v665, 17
      %v742 = vpop.permute.xlu0 %741
      %743 = vrot.lane.b32.xlu0 %v666, 17
      %v744 = vpop.permute.xlu0 %743
      %745 = vrot.lane.b32.xlu0 %v667, 17
      %v746 = vpop.permute.xlu0 %745
      %747 = vrot.lane.b32.xlu0 %v668, 17
      %v748 = vpop.permute.xlu0 %747
      %749 = vrot.lane.b32.xlu0 %v669, 17
      %v750 = vpop.permute.xlu0 %749
      %751 = vrot.lane.b32.xlu0 %v670, 17
      %v752 = vpop.permute.xlu0 %751
      %753 = vrot.lane.b32.xlu0 %v671, 17
      %v754 = vpop.permute.xlu0 %753
      %755 = vrot.lane.b32.xlu0 %v672, 17
      %v756 = vpop.permute.xlu0 %755
      %757 = vrot.lane.b32.xlu0 %v673, 17
      %v758 = vpop.permute.xlu0 %757
      %759 = vrot.lane.b32.xlu0 %v674, 17
      %v760 = vpop.permute.xlu0 %759
      %761 = vrot.lane.b32.xlu0 %v675, 17
      %v762 = vpop.permute.xlu0 %761
      %763 = vrot.lane.b32.xlu0 %v676, 17
      %v764 = vpop.permute.xlu0 %763
      %765 = vrot.lane.b32.xlu0 %v677, 17
      %v766 = vpop.permute.xlu0 %765
      %767 = vrot.lane.b32.xlu0 %v678, 17
      %v768 = vpop.permute.xlu0 %767
      %vm769 = vcmask 138240
      %v770 = vsel %vm769, %v716, %v718
      %v771 = vsel %vm769, %v718, %v720
      %v772 = vsel %vm769, %v722, %v724
      %v773 = vsel %vm769, %v724, %v726
      %v774 = vsel %vm769, %v728, %v730
      %v775 = vsel %vm769, %v730, %v732
      %v776 = vsel %vm769, %v734, %v736
      %v777 = vsel %vm769, %v736, %v738
      %v778 = vsel %vm769, %v740, %v742
      %v779 = vsel %vm769, %v742, %v744
      %v780 = vsel %vm769, %v746, %v748
      %v781 = vsel %vm769, %v748, %v750
      %v782 = vsel %vm769, %v752, %v754
      %v783 = vsel %vm769, %v754, %v756
      %v784 = vsel %vm769, %v758, %v760
      %v785 = vsel %vm769, %v760, %v762
      %v786 = vsel %vm769, %v764, %v766
      %v787 = vsel %vm769, %v766, %v768
      %vm806 = vcmask 130048
      %v808 = vsel %vm806, %v686, 0
      %810 = vmatprep.subr.bf16.mxu0 %v771
      %811 = vmatpush1.bf16.msra.mxu0 %v770
      %812 = vmatprep.subr.bf16.mxu0 %v773
      %813 = vmatpush1.bf16.msra.mxu0 %v772
      %814 = vmatprep.subr.bf16.mxu0 %v775
      %815 = vmatpush1.bf16.msra.mxu0 %v774
      %816 = vmatprep.subr.bf16.mxu0 %v777
      %817 = vmatpush1.bf16.msra.mxu0 %v776
      %818 = vmatprep.subr.bf16.mxu0 %v779
      %819 = vmatpush1.bf16.msra.mxu0 %v778
      %820 = vmatprep.subr.bf16.mxu0 %v781
      %821 = vmatpush1.bf16.msra.mxu0 %v780
      %822 = vmatprep.subr.bf16.mxu0 %v783
      %823 = vmatpush1.bf16.msra.mxu0 %v782
      %824 = vmatprep.subr.bf16.mxu0 %v785
      %825 = vmatpush1.bf16.msra.mxu0 %v784
      %826 = vmatprep.subr.bf16.mxu0 %v787
      %827 = vmatpush1.bf16.msra.mxu0 %v786
      %828 = vmatprep.subr.bf16.mxu0 0
      %829 = vmatpush1.bf16.msra.mxu0 0
      %830 = vmatprep.subr.bf16.mxu0 0
      %831 = vmatpush1.bf16.msra.mxu0 0
      %832 = vmatprep.subr.bf16.mxu0 0
      %833 = vmatpush1.bf16.msra.mxu0 0
      %834 = vmatprep.subr.bf16.mxu0 0
      %835 = vmatpush1.bf16.msra.mxu0 0
      %836 = vmatprep.subr.bf16.mxu0 0
      %837 = vmatpush1.bf16.msra.mxu0 0
      %838 = vmatprep.subr.bf16.mxu0 0
      %839 = vmatpush1.bf16.msra.mxu0 0
      %840 = vmatprep.subr.bf16.mxu0 0
      %841 = vmatpush1.bf16.msra.mxu0 0
      %842 = vmatprep.mubr.bf16.mxu0 %v808
      %843 = vmatmul.mubr.bf16.gmra.mrb[0].mxu0 %v685
      %v844 = vpop.f32.mrb[0].mxu0
      %v845 = vadd.f32 0.0, %v844
      %v846 = vpop.f32.mrb[0].mxu0
      %v847 = vadd.f32 0.0, %v846
      %v848 = vpop.f32.mrb[0].mxu0
      %v849 = vadd.f32 0.0, %v848
      %v850 = vpop.f32.mrb[0].mxu0
      %v851 = vadd.f32 0.0, %v850
      %852 = vdwg.mxu0
      %853 = vst [vmem:[%s293] sm:$0xff] %v845
      %854 = vst [vmem:[%s293 + $0x8] sm:$0xff] %v847
      %855 = vst [vmem:[%s293 + $0x10] sm:$0xff] %v849
      %856 = vst [vmem:[%s293 + $0x18] sm:$0xff] %v851
      %v857 = vadd.f32 %v845, %v847
      %858 = vadd.xlane.f32.xlu0 %v857
      %v859 = vpop.xlane.xlu0 %858
      %v860 = vadd.f32 %v849, %v851
      %861 = vadd.xlane.f32.xlu0 %v860
      %v862 = vpop.xlane.xlu0 %861
      %863 = vst.msk [vmem:[%s298] sm:$0xff] %vm420, %v859
      %864 = vst.msk [vmem:[%s298 + $0x8] sm:$0xff] %vm420, %v862
      %v865 = vmul.f32 %v845, %v845
      %v866 = vmul.f32 %v847, %v847
      %v867 = vmul.f32 %v849, %v849
      %v868 = vmul.f32 %v851, %v851
      %v869 = vadd.f32 %v865, %v866
      %870 = vadd.xlane.f32.xlu0 %v869
      %v871 = vpop.xlane.xlu0 %870
      %v872 = vadd.f32 %v867, %v868
      %873 = vadd.xlane.f32.xlu0 %v872
      %v874 = vpop.xlane.xlu0 %873
      %875 = vst.msk [vmem:[%s303] sm:$0xff] %vm420, %v871
      %876 = vst.msk [vmem:[%s303 + $0x8] sm:$0xff] %vm420, %v874
      %p877 = scmp.lt.s32.totalorder %s19, 1
      %s878 = scalar_select %p877, %s19, 1
      %s879 = smul.addr %s878, 4
      %s880 = smul.addr %s879, 8
      %s881 = scalar_lea.vmem %s5, %s880
      %p882 = scmp.lt.s32.totalorder %s19, 1
      %s883 = scalar_select %p882, %s19, 1
      %s884 = smul.addr %s883, 2
      %s885 = smul.addr %s884, 8
      %s886 = scalar_lea.vmem %s6, %s885
      %p887 = scmp.lt.s32.totalorder %s19, 1
      %s888 = scalar_select %p887, %s19, 1
      %s889 = smul.addr %s888, 2
      %s890 = smul.addr %s889, 8
      %s891 = scalar_lea.vmem %s7, %s890
      // Predicated region
      $region41: #{residual_block.4} parent=39 // pred_check
        %p892 = pneg %p147
      $region42: #{residual_block.4} parent=39 // pred_check_branch
        %894 = sbr.rel (%p892) target = $region44
      $region43: #{residual_block.4} parent=39 // pred_region
        _
      $region44: #{residual_block.4} parent=39 // pred_fallthru
        _
      // Predicated region
      $region45: #{residual_block.4} parent=39 // pred_check
        %p895 = pneg %p173
      $region46: #{residual_block.4} parent=39 // pred_check_branch
        %897 = sbr.rel (%p895) target = $region48
      $region47: #{residual_block.4} parent=39 // pred_region
        _
      $region48: #{residual_block.4} parent=39 // pred_fallthru
        _
      // Predicated region
      $region49: #{residual_block.4} parent=39 // pred_check
        %p898 = pneg %p199
      $region50: #{residual_block.4} parent=39 // pred_check_branch
        %900 = sbr.rel (%p898) target = $region52
      $region51: #{residual_block.4} parent=39 // pred_region
        _
      $region52: #{residual_block.4} parent=39 // pred_fallthru
        _
    $region40: #{residual_block.4} parent=5 // pred_fallthru
      _
    %p901 = scmp.le.s32.totalorder 2, %s14
    // Predicated region
    $region53: #{residual_block.4} parent=5 // pred_check
      %p902 = pneg %p901
    $region54: #{residual_block.4} parent=5 // pred_check_branch
      %904 = sbr.rel (%p902) target = $region56
    $region55: #{residual_block.4} parent=5 // pred_region
      %s905 = ssub.s32 %s14, 2
      // Predicated region
      $region57: #{residual_block.4} parent=55 // pred_check
        %p906 = pneg %p153
      $region58: #{residual_block.4} parent=55 // pred_check_branch
        %908 = sbr.rel (%p906) target = $region60
      $region59: #{residual_block.4} parent=55 // pred_region
        %p909 = scmp.lt.s32.totalorder %s20, 1
        %s910 = scalar_select %p909, %s20, 1
        %s911 = smul.addr %s910, 4
        %s912 = smul.addr %s911, 8
        %s913 = scalar_lea.vmem %s5, %s912
      $region60: #{residual_block.4} parent=55 // pred_fallthru
        _
      // Predicated region
      $region61: #{residual_block.4} parent=55 // pred_check
        %p914 = pneg %p179
      $region62: #{residual_block.4} parent=55 // pred_check_branch
        %916 = sbr.rel (%p914) target = $region64
      $region63: #{residual_block.4} parent=55 // pred_region
        %p917 = scmp.lt.s32.totalorder %s20, 1
        %s918 = scalar_select %p917, %s20, 1
        %s919 = smul.addr %s918, 2
        %s920 = smul.addr %s919, 8
        %s921 = scalar_lea.vmem %s6, %s920
      $region64: #{residual_block.4} parent=55 // pred_fallthru
        _
      // Predicated region
      $region65: #{residual_block.4} parent=55 // pred_check
        %p922 = pneg %p205
      $region66: #{residual_block.4} parent=55 // pred_check_branch
        %924 = sbr.rel (%p922) target = $region68
      $region67: #{residual_block.4} parent=55 // pred_region
        %p925 = scmp.lt.s32.totalorder %s20, 1
        %s926 = scalar_select %p925, %s20, 1
        %s927 = smul.addr %s926, 2
        %s928 = smul.addr %s927, 8
        %s929 = scalar_lea.vmem %s7, %s928
      $region68: #{residual_block.4} parent=55 // pred_fallthru
        _
    $region56: #{residual_block.4} parent=5 // pred_fallthru
      _
  $region6: #{residual_block.4} parent=0 // loop_footer
    %s18 = sadd.s32 1, %s14
  $region7: #{residual_block.4} parent=0 // loop_footer_branch
    %13 = sbr.rel target = $region3
  $region8: #{residual_block.4} parent=0 // loop_exit
    _

// kernel: residual_block.3
$region0: #{residual_block.3}
  #allocation0 [shape = 'u32[]', space=smem, size = 0x4, offset = 0x4, fixed_abs, tag = 'smem constant byte address 0x4 - core index']
  #allocation1 [shape = 'u32[144,128]{1,0:T(1,128)}', space=vmem, size = 0x12000, scoped, tag = 'internal scratch']
  %s0 = inlined_call_operand.vmem [shape: f32[2,8,256], index: 0, kind: input, shape index: {}]
  %s1 = inlined_call_operand.vmem [shape: bf16[32,72], index: 1, kind: input, shape index: {}]
  %s2 = inlined_call_operand.vmem [shape: f32[2,256], index: 2, kind: input, shape index: {}]
  %s3 = inlined_call_operand.vmem [shape: f32[2,16,256], index: 3, kind: output, shape index: {0}]
  %s4 = inlined_call_operand.vmem [shape: f32[2,16,256], index: 4, kind: output, shape index: {1}]
  %s5 = inlined_call_operand.vmem [shape: f32[2,16,1], index: 5, kind: output, shape index: {2}]
  %s6 = inlined_call_operand.vmem [shape: f32[2,16,1], index: 6, kind: output, shape index: {3}]
  %7 = xla_tuple %s3, %s4, %s5, %s6
  %s8 = sld [smem:[#allocation0]]
  $region69: #{residual_block.3} parent=0
    _
  %s10 = ssub.s32 1, %s8
  %s11 = scalar_select 0, %s10, %s8
  loop: start=0, step=1, limit=4
  $region2: #{residual_block.3} parent=0 // loop_pre_header
    _
  $region3: #{residual_block.3} parent=0 // loop_header
    %s13 = sphi 0, %s17
    %p14 = scmp.ge.s32.totalorder %s13, 4
    %s23 = sphi 0, %s25
    %s26 = sphi 0, %s23
    %s27 = sphi 0, %s26
    %s43 = sphi 0, %s27
    %s47 = sphi 0, %s47
    %s49 = sphi 0, %s47
    %s50 = sphi 0, %s49
    %s64 = sphi 0, %s50
    %s68 = sphi 0, %s68
    %s70 = sphi 0, %s68
    %s71 = sphi 0, %s70
    %s85 = sphi 0, %s71
    %s91 = sphi 0, %s93
    %s94 = sphi 0, %s91
    %s95 = sphi 0, %s94
    %s111 = sphi 0, %s95
    %s117 = sphi 0, %s119
    %s120 = sphi 0, %s117
    %s121 = sphi 0, %s120
    %s137 = sphi 0, %s121
    %s143 = sphi 0, %s145
    %s146 = sphi 0, %s143
    %s147 = sphi 0, %s146
    %s163 = sphi 0, %s147
    %s169 = sphi 0, %s171
    %s172 = sphi 0, %s169
    %s173 = sphi 0, %s172
    %s189 = sphi 0, %s173
  $region4: #{residual_block.3} parent=0 // loop_header_branch
    %16 = sbr.rel (%p14) target = $region8
  $region5: #{residual_block.3} parent=0 // loop_body
    %s18 = ssub.s32 %s13, 1
    %s19 = ssub.s32 %s13, 2
    %s20 = sadd.s32 %s13, 1
    %s21 = ssub.s32 %s13, %s20
    %p22 = scmp.eq.s32.totalorder %s21, 0
    %s24 = sadd.s32 %s23, 1
    %s25 = scalar_select %p22, %s23, %s24
    %p28 = pneg %p22
    %p29 = scmp.eq.s32.totalorder %s13, 1
    %p30 = por %p28, %p29
    %p31 = scmp.ne.s32.totalorder %s23, %s26
    %p32 = scmp.eq.s32.totalorder %s13, 0
    %p33 = por %p31, %p32
    %p34 = scmp.ne.s32.totalorder %s23, %s26
    %p35 = scmp.eq.s32.totalorder %s18, 1
    %p36 = por %p34, %p35
    %p37 = scmp.ne.s32.totalorder %s26, %s27
    %p38 = scmp.eq.s32.totalorder %s18, 0
    %p39 = por %p37, %p38
    %p40 = scmp.ne.s32.totalorder %s26, %s27
    %p41 = scmp.eq.s32.totalorder %s19, 1
    %p42 = por %p40, %p41
    %p44 = scmp.ne.s32.totalorder %s27, %s43
    %p45 = scmp.eq.s32.totalorder %s19, 0
    %p46 = por %p44, %p45
    %s48 = sadd.s32 %s47, 1
    %p51 = scmp.eq.s32.totalorder %s13, 1
    %p52 = scmp.ne.s32.totalorder %s47, %s49
    %p53 = scmp.eq.s32.totalorder %s13, 0
    %p54 = por %p52, %p53
    %p55 = scmp.ne.s32.totalorder %s47, %s49
    %p56 = scmp.eq.s32.totalorder %s18, 1
    %p57 = por %p55, %p56
    %p58 = scmp.ne.s32.totalorder %s49, %s50
    %p59 = scmp.eq.s32.totalorder %s18, 0
    %p60 = por %p58, %p59
    %p61 = scmp.ne.s32.totalorder %s49, %s50
    %p62 = scmp.eq.s32.totalorder %s19, 1
    %p63 = por %p61, %p62
    %p65 = scmp.ne.s32.totalorder %s50, %s64
    %p66 = scmp.eq.s32.totalorder %s19, 0
    %p67 = por %p65, %p66
    %s69 = sadd.s32 %s68, 1
    %p72 = scmp.eq.s32.totalorder %s13, 1
    %p73 = scmp.ne.s32.totalorder %s68, %s70
    %p74 = scmp.eq.s32.totalorder %s13, 0
    %p75 = por %p73, %p74
    %p76 = scmp.ne.s32.totalorder %s68, %s70
    %p77 = scmp.eq.s32.totalorder %s18, 1
    %p78 = por %p76, %p77
    %p79 = scmp.ne.s32.totalorder %s70, %s71
    %p80 = scmp.eq.s32.totalorder %s18, 0
    %p81 = por %p79, %p80
    %p82 = scmp.ne.s32.totalorder %s70, %s71
    %p83 = scmp.eq.s32.totalorder %s19, 1
    %p84 = por %p82, %p83
    %p86 = scmp.ne.s32.totalorder %s71, %s85
    %p87 = scmp.eq.s32.totalorder %s19, 0
    %p88 = por %p86, %p87
    %s89 = ssub.s32 %s13, %s20
    %p90 = scmp.eq.s32.totalorder %s89, 0
    %s92 = sadd.s32 %s91, 1
    %s93 = scalar_select %p90, %s91, %s92
    %p96 = pneg %p90
    %p97 = scmp.eq.s32.totalorder %s13, 1
    %p98 = por %p96, %p97
    %p99 = scmp.ne.s32.totalorder %s91, %s94
    %p100 = scmp.eq.s32.totalorder %s13, 0
    %p101 = por %p99, %p100
    %p102 = scmp.ne.s32.totalorder %s91, %s94
    %p103 = scmp.eq.s32.totalorder %s18, 1
    %p104 = por %p102, %p103
    %p105 = scmp.ne.s32.totalorder %s94, %s95
    %p106 = scmp.eq.s32.totalorder %s18, 0
    %p107 = por %p105, %p106
    %p108 = scmp.ne.s32.totalorder %s94, %s95
    %p109 = scmp.eq.s32.totalorder %s19, 1
    %p110 = por %p108, %p109
    %p112 = scmp.ne.s32.totalorder %s95, %s111
    %p113 = scmp.eq.s32.totalorder %s19, 0
    %p114 = por %p112, %p113
    %s115 = ssub.s32 %s13, %s20
    %p116 = scmp.eq.s32.totalorder %s115, 0
    %s118 = sadd.s32 %s117, 1
    %s119 = scalar_select %p116, %s117, %s118
    %p122 = pneg %p116
    %p123 = scmp.eq.s32.totalorder %s13, 1
    %p124 = por %p122, %p123
    %p125 = scmp.ne.s32.totalorder %s117, %s120
    %p126 = scmp.eq.s32.totalorder %s13, 0
    %p127 = por %p125, %p126
    %p128 = scmp.ne.s32.totalorder %s117, %s120
    %p129 = scmp.eq.s32.totalorder %s18, 1
    %p130 = por %p128, %p129
    %p131 = scmp.ne.s32.totalorder %s120, %s121
    %p132 = scmp.eq.s32.totalorder %s18, 0
    %p133 = por %p131, %p132
    %p134 = scmp.ne.s32.totalorder %s120, %s121
    %p135 = scmp.eq.s32.totalorder %s19, 1
    %p136 = por %p134, %p135
    %p138 = scmp.ne.s32.totalorder %s121, %s137
    %p139 = scmp.eq.s32.totalorder %s19, 0
    %p140 = por %p138, %p139
    %s141 = ssub.s32 %s13, %s20
    %p142 = scmp.eq.s32.totalorder %s141, 0
    %s144 = sadd.s32 %s143, 1
    %s145 = scalar_select %p142, %s143, %s144
    %p148 = pneg %p142
    %p149 = scmp.eq.s32.totalorder %s13, 1
    %p150 = por %p148, %p149
    %p151 = scmp.ne.s32.totalorder %s143, %s146
    %p152 = scmp.eq.s32.totalorder %s13, 0
    %p153 = por %p151, %p152
    %p154 = scmp.ne.s32.totalorder %s143, %s146
    %p155 = scmp.eq.s32.totalorder %s18, 1
    %p156 = por %p154, %p155
    %p157 = scmp.ne.s32.totalorder %s146, %s147
    %p158 = scmp.eq.s32.totalorder %s18, 0
    %p159 = por %p157, %p158
    %p160 = scmp.ne.s32.totalorder %s146, %s147
    %p161 = scmp.eq.s32.totalorder %s19, 1
    %p162 = por %p160, %p161
    %p164 = scmp.ne.s32.totalorder %s147, %s163
    %p165 = scmp.eq.s32.totalorder %s19, 0
    %p166 = por %p164, %p165
    %s167 = ssub.s32 %s13, %s20
    %p168 = scmp.eq.s32.totalorder %s167, 0
    %s170 = sadd.s32 %s169, 1
    %s171 = scalar_select %p168, %s169, %s170
    %p174 = pneg %p168
    %p175 = scmp.eq.s32.totalorder %s13, 1
    %p176 = por %p174, %p175
    %p177 = scmp.ne.s32.totalorder %s169, %s172
    %p178 = scmp.eq.s32.totalorder %s13, 0
    %p179 = por %p177, %p178
    %p180 = scmp.ne.s32.totalorder %s169, %s172
    %p181 = scmp.eq.s32.totalorder %s18, 1
    %p182 = por %p180, %p181
    %p183 = scmp.ne.s32.totalorder %s172, %s173
    %p184 = scmp.eq.s32.totalorder %s18, 0
    %p185 = por %p183, %p184
    %p186 = scmp.ne.s32.totalorder %s172, %s173
    %p187 = scmp.eq.s32.totalorder %s19, 1
    %p188 = por %p186, %p187
    %p190 = scmp.ne.s32.totalorder %s173, %s189
    %p191 = scmp.eq.s32.totalorder %s19, 0
    %p192 = por %p190, %p191
    %p193 = scmp.le.s32.totalorder 1, %s13
    %p194 = scmp.lt.s32.totalorder %s13, 3
    %p195 = pnand %p193, %p194
    %p196 = pneg %p195
    // Predicated region
    $region9: #{residual_block.3} parent=5 // pred_check
      _
    $region10: #{residual_block.3} parent=5 // pred_check_branch
      %198 = sbr.rel (%p195) target = $region12
    $region11: #{residual_block.3} parent=5 // pred_region
      %s199 = ssub.s32 %s13, 1
      // Predicated region
      $region13: #{residual_block.3} parent=11 // pred_check
        %p200 = pneg %p60
      $region14: #{residual_block.3} parent=11 // pred_check_branch
        %202 = sbr.rel (%p200) target = $region16
      $region15: #{residual_block.3} parent=11 // pred_region
        _
      $region16: #{residual_block.3} parent=11 // pred_fallthru
        _
      // Predicated region
      $region17: #{residual_block.3} parent=11 // pred_check
        %p203 = pneg %p81
      $region18: #{residual_block.3} parent=11 // pred_check_branch
        %205 = sbr.rel (%p203) target = $region20
      $region19: #{residual_block.3} parent=11 // pred_region
        _
      $region20: #{residual_block.3} parent=11 // pred_fallthru
        _
    $region12: #{residual_block.3} parent=5 // pred_fallthru
      _
    %p206 = scmp.lt.s32.totalorder %s13, 2
    // Predicated region
    $region21: #{residual_block.3} parent=5 // pred_check
      %p207 = pneg %p206
    $region22: #{residual_block.3} parent=5 // pred_check_branch
      %209 = sbr.rel (%p207) target = $region24
    $region23: #{residual_block.3} parent=5 // pred_region
      // Predicated region
      $region25: #{residual_block.3} parent=23 // pred_check
        %p210 = pneg %p33
      $region26: #{residual_block.3} parent=23 // pred_check_branch
        %212 = sbr.rel (%p210) target = $region28
      $region27: #{residual_block.3} parent=23 // pred_region
        %p213 = scmp.lt.s32.totalorder %s13, 1
        %s214 = scalar_select %p213, %s13, 1
        %s215 = smul.addr %s214, 2
        %s216 = smul.addr %s215, 8
        %s217 = scalar_lea.vmem %s0, %s216
      $region28: #{residual_block.3} parent=23 // pred_fallthru
        _
    $region24: #{residual_block.3} parent=5 // pred_fallthru
      _
    %p218 = scmp.le.s32.totalorder 1, %s13
    %p219 = scmp.lt.s32.totalorder %s13, 3
    %p220 = pnand %p218, %p219
    %p221 = pneg %p220
    // Predicated region
    $region29: #{residual_block.3} parent=5 // pred_check
      _
    $region30: #{residual_block.3} parent=5 // pred_check_branch
      %223 = sbr.rel (%p220) target = $region32
    $region31: #{residual_block.3} parent=5 // pred_region
      %s224 = ssub.s32 %s13, 1
      %p225 = scmp.lt.s32.totalorder %s18, 1
      %s226 = scalar_select %p225, %s18, 1
      %s227 = smul.addr %s226, 2
      %s228 = smul.addr %s227, 8
      %s229 = scalar_lea.vmem %s0, %s228
      %p230 = pneg %p39
      %p231 = pneg %p36
      %p232 = pneg %p60
      %p233 = pneg %p57
      %p234 = pneg %p81
      %p235 = pneg %p78
      %p236 = pneg %p107
      %p237 = pneg %p104
      %p238 = scmp.lt.s32.totalorder %s18, 1
      %s239 = scalar_select %p238, %s18, 1
      %s240 = smul.addr %s239, 4
      %s241 = smul.addr %s240, 8
      %s242 = scalar_lea.vmem %s3, %s241
      %p243 = pneg %p133
      %p244 = pneg %p130
      %p245 = scmp.lt.s32.totalorder %s18, 1
      %s246 = scalar_select %p245, %s18, 1
      %s247 = smul.addr %s246, 4
      %s248 = smul.addr %s247, 8
      %s249 = scalar_lea.vmem %s4, %s248
      %p250 = pneg %p159
      %p251 = pneg %p156
      %p252 = scmp.lt.s32.totalorder %s18, 1
      %s253 = scalar_select %p252, %s18, 1
      %s254 = smul.addr %s253, 2
      %s255 = smul.addr %s254, 8
      %s256 = scalar_lea.vmem %s5, %s255
      %p257 = pneg %p185
      %p258 = pneg %p182
      %p259 = scmp.lt.s32.totalorder %s18, 1
      %s260 = scalar_select %p259, %s18, 1
      %s261 = smul.addr %s260, 2
      %s262 = smul.addr %s261, 8
      %s263 = scalar_lea.vmem %s6, %s262
      %p264 = scmp.lt.s32.totalorder %s18, 1
      %s265 = scalar_select %p264, %s18, 1
      %s266 = smul.addr %s265, 2
      %s267 = smul.addr %s266, 8
      %s268 = scalar_lea.vmem %s0, %s267
      %p269 = scmp.lt.s32.totalorder %s18, 1
      %s270 = scalar_select %p269, %s18, 1
      %s271 = smul.addr %s270, 4
      %s272 = smul.addr %s271, 8
      %s273 = scalar_lea.vmem %s3, %s272
      %p274 = scmp.lt.s32.totalorder %s18, 1
      %s275 = scalar_select %p274, %s18, 1
      %s276 = smul.addr %s275, 4
      %s277 = smul.addr %s276, 8
      %s278 = scalar_lea.vmem %s4, %s277
      %p279 = scmp.lt.s32.totalorder %s18, 1
      %s280 = scalar_select %p279, %s18, 1
      %s281 = smul.addr %s280, 2
      %s282 = smul.addr %s281, 8
      %s283 = scalar_lea.vmem %s5, %s282
      %p284 = scmp.lt.s32.totalorder %s18, 1
      %s285 = scalar_select %p284, %s18, 1
      %s286 = smul.addr %s285, 2
      %s287 = smul.addr %s286, 8
      %s288 = scalar_lea.vmem %s6, %s287
      %v290 = vld [vmem:[%s268] sm:$0xff]
      %v291 = vld [vmem:[%s268 + $0x8] sm:$0xff]
      %v292 = vld [vmem:[%s2] ss:$2 sm:$0x3]
      %s293 = scalar_lea.vmem %s2, 1
      %v294 = vld [vmem:[%s293] ss:$2 sm:$0x3]
      %v296 = vlaneseq
      %v297 = vshrl.u32 %v296, 7
      %v298 = vsub.s32 0, %v297
      %v299 = vrot.slane %v292, %v298
      %v300 = vlaneseq
      %v301 = vshrl.u32 %v300, 7
      %v302 = vsub.s32 1, %v301
      %v303 = vrot.slane %v292, %v302
      %304 = vrot.lane.b32.xlu0 %v299, 111
      %v305 = vpop.permute.xlu0 %304
      %306 = vrot.lane.b32.xlu0 %v303, 111
      %v307 = vpop.permute.xlu0 %306
      %vm308 = vcmask 908288
      %v309 = vsel %vm308, %v305, %v307
      %v313 = vmul.f32 %v305, 0.0
      %v314 = vmul.f32 %v290, %v309
      %v315 = vmul.f32 %v291, %v307
      %v317 = vlaneseq
      %v318 = vshrl.u32 %v317, 7
      %v319 = vsub.s32 0, %v318
      %v320 = vrot.slane %v294, %v319
      %v321 = vlaneseq
      %v322 = vshrl.u32 %v321, 7
      %v323 = vsub.s32 1, %v322
      %v324 = vrot.slane %v294, %v323
      %325 = vrot.lane.b32.xlu0 %v320, 113
      %v326 = vpop.permute.xlu0 %325
      %327 = vrot.lane.b32.xlu0 %v324, 113
      %v328 = vpop.permute.xlu0 %327
      %vm329 = vcmask 924672
      %v330 = vsel %vm329, %v326, %v328
      %v334 = vmul.f32 %v326, 0.0
      %v335 = vmul.f32 %v290, %v330
      %v336 = vmul.f32 %v291, %v328
      %337 = vrot.lane.b32.xlu0 %v299, 127
      %v338 = vpop.permute.xlu0 %337
      %339 = vrot.lane.b32.xlu0 %v303, 127
      %v340 = vpop.permute.xlu0 %339
      %vm341 = vcmask 1039360
      %v342 = vsel %vm341, %v338, %v340
      %v346 = vmul.f32 %v338, 0.0
      %v347 = vmul.f32 %v290, %v342
      %v348 = vmul.f32 %v291, %v340
      %349 = vrot.lane.b32.xlu0 %v320, 1
      %v350 = vpop.permute.xlu0 %349
      %351 = vrot.lane.b32.xlu0 %v324, 1
      %v352 = vpop.permute.xlu0 %351
      %vm353 = vcmask 7168
      %v354 = vsel %vm353, %v350, %v352
      %v358 = vmul.f32 %v290, %v350
      %v359 = vmul.f32 %v291, %v354
      %v360 = vmul.f32 %v352, 0.0
      %361 = vrot.lane.b32.xlu0 %v299, 15
      %v362 = vpop.permute.xlu0 %361
      %363 = vrot.lane.b32.xlu0 %v303, 15
      %v364 = vpop.permute.xlu0 %363
      %vm365 = vcmask 121856
      %v366 = vsel %vm365, %v362, %v364
      %v370 = vmul.f32 %v290, %v362
      %v371 = vmul.f32 %v291, %v366
      %v372 = vmul.f32 %v364, 0.0
      %373 = vrot.lane.b32.xlu0 %v320, 17
      %v374 = vpop.permute.xlu0 %373
      %375 = vrot.lane.b32.xlu0 %v324, 17
      %v376 = vpop.permute.xlu0 %375
      %vm377 = vcmask 138240
      %v378 = vsel %vm377, %v374, %v376
      %v382 = vmul.f32 %v290, %v374
      %v383 = vmul.f32 %v291, %v378
      %v384 = vmul.f32 %v376, 0.0
      %388 = vrot.lane.b32.xlu0 0.0, 127
      %v389 = vpop.permute.xlu0 %388
      %390 = vrot.lane.b32.xlu0 %v290, 127
      %v391 = vpop.permute.xlu0 %390
      %392 = vrot.lane.b32.xlu0 %v291, 127
      %v393 = vpop.permute.xlu0 %392
      %v394 = vsel %vm341, %v389, %v391
      %v395 = vsel %vm341, %v391, %v393
      %402 = vrot.lane.b32.xlu0 %v334, 126
      %v403 = vpop.permute.xlu0 %402
      %404 = vrot.lane.b32.xlu0 %v335, 126
      %v405 = vpop.permute.xlu0 %404
      %406 = vrot.lane.b32.xlu0 %v336, 126
      %v407 = vpop.permute.xlu0 %406
      %vm408 = vcmask 1031168
      %v409 = vsel %vm408, %v403, %v405
      %v410 = vsel %vm408, %v405, %v407
      %417 = vrot.lane.b32.xlu0 %v346, 112
      %v418 = vpop.permute.xlu0 %417
      %419 = vrot.lane.b32.xlu0 %v347, 112
      %v420 = vpop.permute.xlu0 %419
      %421 = vrot.lane.b32.xlu0 %v348, 112
      %v422 = vpop.permute.xlu0 %421
      %vm423 = vcmask 916480
      %v424 = vsel %vm423, %v418, %v420
      %v425 = vsel %vm423, %v420, %v422
      %429 = vrot.lane.b32.xlu0 %v290, 111
      %v430 = vpop.permute.xlu0 %429
      %431 = vrot.lane.b32.xlu0 %v291, 111
      %v432 = vpop.permute.xlu0 %431
      %v433 = vsel %vm308, %v430, %v432
      %440 = vrot.lane.b32.xlu0 %v358, 110
      %v441 = vpop.permute.xlu0 %440
      %442 = vrot.lane.b32.xlu0 %v359, 110
      %v443 = vpop.permute.xlu0 %442
      %444 = vrot.lane.b32.xlu0 %v360, 110
      %v445 = vpop.permute.xlu0 %444
      %vm446 = vcmask 900096
      %v447 = vsel %vm446, %v441, %v443
      %v448 = vsel %vm446, %v443, %v445
      %455 = vrot.lane.b32.xlu0 %v370, 96
      %v456 = vpop.permute.xlu0 %455
      %457 = vrot.lane.b32.xlu0 %v371, 96
      %v458 = vpop.permute.xlu0 %457
      %459 = vrot.lane.b32.xlu0 %v372, 96
      %v460 = vpop.permute.xlu0 %459
      %vm461 = vcmask 785408
      %v462 = vsel %vm461, %v456, %v458
      %v463 = vsel %vm461, %v458, %v460
      %467 = vrot.lane.b32.xlu0 %v290, 95
      %v468 = vpop.permute.xlu0 %467
      %469 = vrot.lane.b32.xlu0 %v291, 95
      %v470 = vpop.permute.xlu0 %469
      %471 = vrot.lane.b32.xlu0 0.0, 95
      %v472 = vpop.permute.xlu0 %471
      %vm473 = vcmask 777216
      %v474 = vsel %vm473, %v468, %v470
      %v475 = vsel %vm473, %v470, %v472
      %482 = vrot.lane.b32.xlu0 %v382, 94
      %v483 = vpop.permute.xlu0 %482
      %484 = vrot.lane.b32.xlu0 %v383, 94
      %v485 = vpop.permute.xlu0 %484
      %486 = vrot.lane.b32.xlu0 %v384, 94
      %v487 = vpop.permute.xlu0 %486
      %vm488 = vcmask 769024
      %v489 = vsel %vm488, %v483, %v485
      %v490 = vsel %vm488, %v485, %v487
      %v494 = vld [vmem:[%s1] sm:$0xf]
      %v495 = vld [vmem:[%s1 + $0x4] sm:$0xf]
      %v496 = vld [vmem:[%s1 + $0x8] sm:$0xf]
      %v497 = vld [vmem:[%s1 + $0xc] sm:$0xf]
      %v498 = vpack.c.bf16 %v394, %v313
      %v499 = vpack.c.bf16 %v395, %v314
      %v500 = vpack.c.bf16 %v393, %v315
      %v501 = vpack.c.bf16 %v424, %v409
      %v502 = vpack.c.bf16 %v425, %v410
      %v503 = vpack.c.bf16 %v422, %v407
      %v504 = vpack.c.bf16 %v441, %v430
      %v505 = vpack.c.bf16 %v447, %v433
      %v506 = vpack.c.bf16 %v448, %v432
      %v507 = vpack.c.bf16 %v468, %v456
      %v508 = vpack.c.bf16 %v474, %v462
      %v509 = vpack.c.bf16 %v475, %v463
      %v510 = vpack.c.bf16 %v483, %v483
      %v511 = vpack.c.bf16 %v489, %v489
      %v512 = vpack.c.bf16 %v490, %v490
      %v517 = vunpack.c.l.b16 %v494
      %v518 = vunpack.c.l.b16 %v495
      %v519 = vunpack.c.l.b16 %v496
      %v520 = vunpack.c.l.b16 %v497
      %v521 = vpack.c.b16 %v518, %v517
      %v522 = vpack.c.b16 %v520, %v519
      %538 = vrot.lane.b32.xlu0 %v498, 17
      %v539 = vpop.permute.xlu0 %538
      %540 = vrot.lane.b32.xlu0 %v499, 17
      %v541 = vpop.permute.xlu0 %540
      %542 = vrot.lane.b32.xlu0 %v500, 17
      %v543 = vpop.permute.xlu0 %542
      %544 = vrot.lane.b32.xlu0 %v501, 17
      %v545 = vpop.permute.xlu0 %544
      %546 = vrot.lane.b32.xlu0 %v502, 17
      %v547 = vpop.permute.xlu0 %546
      %548 = vrot.lane.b32.xlu0 %v503, 17
      %v549 = vpop.permute.xlu0 %548
      %550 = vrot.lane.b32.xlu0 %v504, 17
      %v551 = vpop.permute.xlu0 %550
      %552 = vrot.lane.b32.xlu0 %v505, 17
      %v553 = vpop.permute.xlu0 %552
      %554 = vrot.lane.b32.xlu0 %v506, 17
      %v555 = vpop.permute.xlu0 %554
      %556 = vrot.lane.b32.xlu0 %v507, 17
      %v557 = vpop.permute.xlu0 %556
      %558 = vrot.lane.b32.xlu0 %v508, 17
      %v559 = vpop.permute.xlu0 %558
      %560 = vrot.lane.b32.xlu0 %v509, 17
      %v561 = vpop.permute.xlu0 %560
      %562 = vrot.lane.b32.xlu0 %v510, 17
      %v563 = vpop.permute.xlu0 %562
      %564 = vrot.lane.b32.xlu0 %v511, 17
      %v565 = vpop.permute.xlu0 %564
      %566 = vrot.lane.b32.xlu0 %v512, 17
      %v567 = vpop.permute.xlu0 %566
      %vm568 = vcmask 138240
      %v569 = vsel %vm568, %v539, %v541
      %v570 = vsel %vm568, %v541, %v543
      %v571 = vsel %vm568, %v545, %v547
      %v572 = vsel %vm568, %v547, %v549
      %v573 = vsel %vm568, %v551, %v553
      %v574 = vsel %vm568, %v553, %v555
      %v575 = vsel %vm568, %v557, %v559
      %v576 = vsel %vm568, %v559, %v561
      %v577 = vsel %vm568, %v563, %v565
      %v578 = vsel %vm568, %v565, %v567
      %vm587 = vcmask 588800
      %v589 = vsel %vm587, %v521, 0
      %v592 = vsel %vm587, %v522, 0
      %vm594 = vcmask 1043456
      %v596 = vsel %vm594, %v577, 0
      %v599 = vsel %vm594, %v578, 0
      %601 = vmatprep.subr.bf16.mxu0 %v570
      %602 = vmatpush1.bf16.msra.mxu0 %v569
      %603 = vmatprep.subr.bf16.mxu0 %v572
      %604 = vmatpush1.bf16.msra.mxu0 %v571
      %605 = vmatprep.subr.bf16.mxu0 %v574
      %606 = vmatpush1.bf16.msra.mxu0 %v573
      %607 = vmatprep.subr.bf16.mxu0 %v576
      %608 = vmatpush1.bf16.msra.mxu0 %v575
      %609 = vmatprep.subr.bf16.mxu0 %v599
      %610 = vmatpush1.bf16.msra.mxu0 %v596
      %611 = vmatprep.subr.bf16.mxu0 0
      %612 = vmatpush1.bf16.msra.mxu0 0
      %613 = vmatprep.subr.bf16.mxu0 0
      %614 = vmatpush1.bf16.msra.mxu0 0
      %615 = vmatprep.subr.bf16.mxu0 0
      %616 = vmatpush1.bf16.msra.mxu0 0
      %617 = vmatprep.subr.bf16.mxu0 0
      %618 = vmatpush1.bf16.msra.mxu0 0
      %619 = vmatprep.subr.bf16.mxu0 0
      %620 = vmatpush1.bf16.msra.mxu0 0
      %621 = vmatprep.subr.bf16.mxu0 0
      %622 = vmatpush1.bf16.msra.mxu0 0
      %623 = vmatprep.subr.bf16.mxu0 0
      %624 = vmatpush1.bf16.msra.mxu0 0
      %625 = vmatprep.subr.bf16.mxu0 0
      %626 = vmatpush1.bf16.msra.mxu0 0
      %627 = vmatprep.subr.bf16.mxu0 0
      %628 = vmatpush1.bf16.msra.mxu0 0
      %629 = vmatprep.subr.bf16.mxu0 0
      %630 = vmatpush1.bf16.msra.mxu0 0
      %631 = vmatprep.subr.bf16.mxu0 0
      %632 = vmatpush1.bf16.msra.mxu0 0
      %633 = vmatprep.mubr.bf16.mxu0 0
      %634 = vmatmul.mubr.bf16.gmra.mrb[0].mxu0 %v589
      %v635 = vpop.f32.mrb[0].mxu0
      %v636 = vadd.f32 0.0, %v635
      %v637 = vpop.f32.mrb[0].mxu0
      %v638 = vadd.f32 0.0, %v637
      %v639 = vpop.f32.mrb[0].mxu0
      %v640 = vadd.f32 0.0, %v639
      %v641 = vpop.f32.mrb[0].mxu0
      %v642 = vadd.f32 0.0, %v641
      %643 = vmatprep.mubr.bf16.mxu0 0
      %644 = vmatmul.mubr.bf16.gmra.mrb[0].mxu0 %v592
      %v645 = vpop.f32.mrb[0].mxu0
      %v646 = vadd.f32 0.0, %v645
      %v647 = vpop.f32.mrb[0].mxu0
      %v648 = vadd.f32 0.0, %v647
      %v649 = vpop.f32.mrb[0].mxu0
      %v650 = vadd.f32 0.0, %v649
      %v651 = vpop.f32.mrb[0].mxu0
      %v652 = vadd.f32 0.0, %v651
      %653 = vdwg.mxu0
      %654 = vst [vmem:[%s273] sm:$0xff] %v636
      %655 = vst [vmem:[%s273 + $0x8] sm:$0xff] %v638
      %656 = vst [vmem:[%s273 + $0x10] sm:$0xff] %v640
      %657 = vst [vmem:[%s273 + $0x18] sm:$0xff] %v642
      %658 = vst [vmem:[%s278] sm:$0xff] %v646
      %659 = vst [vmem:[%s278 + $0x8] sm:$0xff] %v648
      %660 = vst [vmem:[%s278 + $0x10] sm:$0xff] %v650
      %661 = vst [vmem:[%s278 + $0x18] sm:$0xff] %v652
      %v662 = vadd.f32 %v636, %v638
      %663 = vadd.xlane.f32.xlu0 %v662
      %v664 = vpop.xlane.xlu0 %663
      %v665 = vadd.f32 %v640, %v642
      %666 = vadd.xlane.f32.xlu0 %v665
      %v667 = vpop.xlane.xlu0 %666
      %668 = vst.msk [vmem:[%s283] sm:$0xff] %vm353, %v664
      %669 = vst.msk [vmem:[%s283 + $0x8] sm:$0xff] %vm353, %v667
      %v670 = vmul.f32 %v636, %v636
      %v671 = vmul.f32 %v638, %v638
      %v672 = vmul.f32 %v640, %v640
      %v673 = vmul.f32 %v642, %v642
      %v674 = vadd.f32 %v670, %v671
      %675 = vadd.xlane.f32.xlu0 %v674
      %v676 = vpop.xlane.xlu0 %675
      %v677 = vadd.f32 %v672, %v673
      %678 = vadd.xlane.f32.xlu0 %v677
      %v679 = vpop.xlane.xlu0 %678
      %680 = vst.msk [vmem:[%s288] sm:$0xff] %vm353, %v676
      %681 = vst.msk [vmem:[%s288 + $0x8] sm:$0xff] %vm353, %v679
      %p682 = scmp.lt.s32.totalorder %s18, 1
      %s683 = scalar_select %p682, %s18, 1
      %s684 = smul.addr %s683, 4
      %s685 = smul.addr %s684, 8
      %s686 = scalar_lea.vmem %s3, %s685
      %p687 = scmp.lt.s32.totalorder %s18, 1
      %s688 = scalar_select %p687, %s18, 1
      %s689 = smul.addr %s688, 4
      %s690 = smul.addr %s689, 8
      %s691 = scalar_lea.vmem %s4, %s690
      %p692 = scmp.lt.s32.totalorder %s18, 1
      %s693 = scalar_select %p692, %s18, 1
      %s694 = smul.addr %s693, 2
      %s695 = smul.addr %s694, 8
      %s696 = scalar_lea.vmem %s5, %s695
      %p697 = scmp.lt.s32.totalorder %s18, 1
      %s698 = scalar_select %p697, %s18, 1
      %s699 = smul.addr %s698, 2
      %s700 = smul.addr %s699, 8
      %s701 = scalar_lea.vmem %s6, %s700
      // Predicated region
      $region33: #{residual_block.3} parent=31 // pred_check
        %p702 = pneg %p104
      $region34: #{residual_block.3} parent=31 // pred_check_branch
        %704 = sbr.rel (%p702) target = $region36
      $region35: #{residual_block.3} parent=31 // pred_region
        _
      $region36: #{residual_block.3} parent=31 // pred_fallthru
        _
      // Predicated region
      $region37: #{residual_block.3} parent=31 // pred_check
        %p705 = pneg %p130
      $region38: #{residual_block.3} parent=31 // pred_check_branch
        %707 = sbr.rel (%p705) target = $region40
      $region39: #{residual_block.3} parent=31 // pred_region
        _
      $region40: #{residual_block.3} parent=31 // pred_fallthru
        _
      // Predicated region
      $region41: #{residual_block.3} parent=31 // pred_check
        %p708 = pneg %p156
      $region42: #{residual_block.3} parent=31 // pred_check_branch
        %710 = sbr.rel (%p708) target = $region44
      $region43: #{residual_block.3} parent=31 // pred_region
        _
      $region44: #{residual_block.3} parent=31 // pred_fallthru
        _
      // Predicated region
      $region45: #{residual_block.3} parent=31 // pred_check
        %p711 = pneg %p182
      $region46: #{residual_block.3} parent=31 // pred_check_branch
        %713 = sbr.rel (%p711) target = $region48
      $region47: #{residual_block.3} parent=31 // pred_region
        _
      $region48: #{residual_block.3} parent=31 // pred_fallthru
        _
    $region32: #{residual_block.3} parent=5 // pred_fallthru
      _
    %p714 = scmp.le.s32.totalorder 2, %s13
    // Predicated region
    $region49: #{residual_block.3} parent=5 // pred_check
      %p715 = pneg %p714
    $region50: #{residual_block.3} parent=5 // pred_check_branch
      %717 = sbr.rel (%p715) target = $region52
    $region51: #{residual_block.3} parent=5 // pred_region
      %s718 = ssub.s32 %s13, 2
      // Predicated region
      $region53: #{residual_block.3} parent=51 // pred_check
        %p719 = pneg %p110
      $region54: #{residual_block.3} parent=51 // pred_check_branch
        %721 = sbr.rel (%p719) target = $region56
      $region55: #{residual_block.3} parent=51 // pred_region
        %p722 = scmp.lt.s32.totalorder %s19, 1
        %s723 = scalar_select %p722, %s19, 1
        %s724 = smul.addr %s723, 4
        %s725 = smul.addr %s724, 8
        %s726 = scalar_lea.vmem %s3, %s725
      $region56: #{residual_block.3} parent=51 // pred_fallthru
        _
      // Predicated region
      $region57: #{residual_block.3} parent=51 // pred_check
        %p727 = pneg %p136
      $region58: #{residual_block.3} parent=51 // pred_check_branch
        %729 = sbr.rel (%p727) target = $region60
      $region59: #{residual_block.3} parent=51 // pred_region
        %p730 = scmp.lt.s32.totalorder %s19, 1
        %s731 = scalar_select %p730, %s19, 1
        %s732 = smul.addr %s731, 4
        %s733 = smul.addr %s732, 8
        %s734 = scalar_lea.vmem %s4, %s733
      $region60: #{residual_block.3} parent=51 // pred_fallthru
        _
      // Predicated region
      $region61: #{residual_block.3} parent=51 // pred_check
        %p735 = pneg %p162
      $region62: #{residual_block.3} parent=51 // pred_check_branch
        %737 = sbr.rel (%p735) target = $region64
      $region63: #{residual_block.3} parent=51 // pred_region
        %p738 = scmp.lt.s32.totalorder %s19, 1
        %s739 = scalar_select %p738, %s19, 1
        %s740 = smul.addr %s739, 2
        %s741 = smul.addr %s740, 8
        %s742 = scalar_lea.vmem %s5, %s741
      $region64: #{residual_block.3} parent=51 // pred_fallthru
        _
      // Predicated region
      $region65: #{residual_block.3} parent=51 // pred_check
        %p743 = pneg %p188
      $region66: #{residual_block.3} parent=51 // pred_check_branch
        %745 = sbr.rel (%p743) target = $region68
      $region67: #{residual_block.3} parent=51 // pred_region
        %p746 = scmp.lt.s32.totalorder %s19, 1
        %s747 = scalar_select %p746, %s19, 1
        %s748 = smul.addr %s747, 2
        %s749 = smul.addr %s748, 8
        %s750 = scalar_lea.vmem %s6, %s749
      $region68: #{residual_block.3} parent=51 // pred_fallthru
        _
    $region52: #{residual_block.3} parent=5 // pred_fallthru
      _
  $region6: #{residual_block.3} parent=0 // loop_footer
    %s17 = sadd.s32 1, %s13
  $region7: #{residual_block.3} parent=0 // loop_footer_branch
    %12 = sbr.rel target = $region3
  $region8: #{residual_block.3} parent=0 // loop_exit
    _

// kernel: residual_block.5
$region0: #{residual_block.5}
  #allocation0 [shape = 'u32[]', space=smem, size = 0x4, offset = 0x4, fixed_abs, tag = 'smem constant byte address 0x4 - core index']
  #allocation1 [shape = 'u32[144,128]{1,0:T(1,128)}', space=vmem, size = 0x12000, scoped, tag = 'internal scratch']
  %s0 = inlined_call_operand.vmem [shape: f32[2,16,256], index: 0, kind: input, shape index: {}]
  %s1 = inlined_call_operand.vmem [shape: f32[2,16,256], index: 1, kind: input, shape index: {}]
  %s2 = inlined_call_operand.vmem [shape: f32[16,1], index: 2, kind: input, shape index: {}]
  %s3 = inlined_call_operand.vmem [shape: f32[16,1], index: 3, kind: input, shape index: {}]
  %s4 = inlined_call_operand.vmem [shape: f32[2,16,256], index: 4, kind: output, shape index: {}]
  %s5 = sld [smem:[#allocation0]]
  $region49: #{residual_block.5} parent=0
    _
  %s7 = ssub.s32 1, %s5
  %s8 = scalar_select 0, %s7, %s5
  loop: start=0, step=1, limit=4
  $region2: #{residual_block.5} parent=0 // loop_pre_header
    _
  $region3: #{residual_block.5} parent=0 // loop_header
    %s10 = sphi 0, %s14
    %p11 = scmp.ge.s32.totalorder %s10, 4
    %s20 = sphi 0, %s22
    %s23 = sphi 0, %s20
    %s24 = sphi 0, %s23
    %s40 = sphi 0, %s24
    %s46 = sphi 0, %s48
    %s49 = sphi 0, %s46
    %s50 = sphi 0, %s49
    %s66 = sphi 0, %s50
    %s70 = sphi 0, %s70
    %s72 = sphi 0, %s70
    %s73 = sphi 0, %s72
    %s87 = sphi 0, %s73
    %s91 = sphi 0, %s91
    %s93 = sphi 0, %s91
    %s94 = sphi 0, %s93
    %s108 = sphi 0, %s94
    %s114 = sphi 0, %s116
    %s117 = sphi 0, %s114
    %s118 = sphi 0, %s117
    %s134 = sphi 0, %s118
  $region4: #{residual_block.5} parent=0 // loop_header_branch
    %13 = sbr.rel (%p11) target = $region8
  $region5: #{residual_block.5} parent=0 // loop_body
    %s15 = ssub.s32 %s10, 1
    %s16 = ssub.s32 %s10, 2
    %s17 = sadd.s32 %s10, 1
    %s18 = ssub.s32 %s10, %s17
    %p19 = scmp.eq.s32.totalorder %s18, 0
    %s21 = sadd.s32 %s20, 1
    %s22 = scalar_select %p19, %s20, %s21
    %p25 = pneg %p19
    %p26 = scmp.eq.s32.totalorder %s10, 1
    %p27 = por %p25, %p26
    %p28 = scmp.ne.s32.totalorder %s20, %s23
    %p29 = scmp.eq.s32.totalorder %s10, 0
    %p30 = por %p28, %p29
    %p31 = scmp.ne.s32.totalorder %s20, %s23
    %p32 = scmp.eq.s32.totalorder %s15, 1
    %p33 = por %p31, %p32
    %p34 = scmp.ne.s32.totalorder %s23, %s24
    %p35 = scmp.eq.s32.totalorder %s15, 0
    %p36 = por %p34, %p35
    %p37 = scmp.ne.s32.totalorder %s23, %s24
    %p38 = scmp.eq.s32.totalorder %s16, 1
    %p39 = por %p37, %p38
    %p41 = scmp.ne.s32.totalorder %s24, %s40
    %p42 = scmp.eq.s32.totalorder %s16, 0
    %p43 = por %p41, %p42
    %s44 = ssub.s32 %s10, %s17
    %p45 = scmp.eq.s32.totalorder %s44, 0
    %s47 = sadd.s32 %s46, 1
    %s48 = scalar_select %p45, %s46, %s47
    %p51 = pneg %p45
    %p52 = scmp.eq.s32.totalorder %s10, 1
    %p53 = por %p51, %p52
    %p54 = scmp.ne.s32.totalorder %s46, %s49
    %p55 = scmp.eq.s32.totalorder %s10, 0
    %p56 = por %p54, %p55
    %p57 = scmp.ne.s32.totalorder %s46, %s49
    %p58 = scmp.eq.s32.totalorder %s15, 1
    %p59 = por %p57, %p58
    %p60 = scmp.ne.s32.totalorder %s49, %s50
    %p61 = scmp.eq.s32.totalorder %s15, 0
    %p62 = por %p60, %p61
    %p63 = scmp.ne.s32.totalorder %s49, %s50
    %p64 = scmp.eq.s32.totalorder %s16, 1
    %p65 = por %p63, %p64
    %p67 = scmp.ne.s32.totalorder %s50, %s66
    %p68 = scmp.eq.s32.totalorder %s16, 0
    %p69 = por %p67, %p68
    %s71 = sadd.s32 %s70, 1
    %p74 = scmp.eq.s32.totalorder %s10, 1
    %p75 = scmp.ne.s32.totalorder %s70, %s72
    %p76 = scmp.eq.s32.totalorder %s10, 0
    %p77 = por %p75, %p76
    %p78 = scmp.ne.s32.totalorder %s70, %s72
    %p79 = scmp.eq.s32.totalorder %s15, 1
    %p80 = por %p78, %p79
    %p81 = scmp.ne.s32.totalorder %s72, %s73
    %p82 = scmp.eq.s32.totalorder %s15, 0
    %p83 = por %p81, %p82
    %p84 = scmp.ne.s32.totalorder %s72, %s73
    %p85 = scmp.eq.s32.totalorder %s16, 1
    %p86 = por %p84, %p85
    %p88 = scmp.ne.s32.totalorder %s73, %s87
    %p89 = scmp.eq.s32.totalorder %s16, 0
    %p90 = por %p88, %p89
    %s92 = sadd.s32 %s91, 1
    %p95 = scmp.eq.s32.totalorder %s10, 1
    %p96 = scmp.ne.s32.totalorder %s91, %s93
    %p97 = scmp.eq.s32.totalorder %s10, 0
    %p98 = por %p96, %p97
    %p99 = scmp.ne.s32.totalorder %s91, %s93
    %p100 = scmp.eq.s32.totalorder %s15, 1
    %p101 = por %p99, %p100
    %p102 = scmp.ne.s32.totalorder %s93, %s94
    %p103 = scmp.eq.s32.totalorder %s15, 0
    %p104 = por %p102, %p103
    %p105 = scmp.ne.s32.totalorder %s93, %s94
    %p106 = scmp.eq.s32.totalorder %s16, 1
    %p107 = por %p105, %p106
    %p109 = scmp.ne.s32.totalorder %s94, %s108
    %p110 = scmp.eq.s32.totalorder %s16, 0
    %p111 = por %p109, %p110
    %s112 = ssub.s32 %s10, %s17
    %p113 = scmp.eq.s32.totalorder %s112, 0
    %s115 = sadd.s32 %s114, 1
    %s116 = scalar_select %p113, %s114, %s115
    %p119 = pneg %p113
    %p120 = scmp.eq.s32.totalorder %s10, 1
    %p121 = por %p119, %p120
    %p122 = scmp.ne.s32.totalorder %s114, %s117
    %p123 = scmp.eq.s32.totalorder %s10, 0
    %p124 = por %p122, %p123
    %p125 = scmp.ne.s32.totalorder %s114, %s117
    %p126 = scmp.eq.s32.totalorder %s15, 1
    %p127 = por %p125, %p126
    %p128 = scmp.ne.s32.totalorder %s117, %s118
    %p129 = scmp.eq.s32.totalorder %s15, 0
    %p130 = por %p128, %p129
    %p131 = scmp.ne.s32.totalorder %s117, %s118
    %p132 = scmp.eq.s32.totalorder %s16, 1
    %p133 = por %p131, %p132
    %p135 = scmp.ne.s32.totalorder %s118, %s134
    %p136 = scmp.eq.s32.totalorder %s16, 0
    %p137 = por %p135, %p136
    %p138 = scmp.le.s32.totalorder 1, %s10
    %p139 = scmp.lt.s32.totalorder %s10, 3
    %p140 = pnand %p138, %p139
    %p141 = pneg %p140
    // Predicated region
    $region9: #{residual_block.5} parent=5 // pred_check
      _
    $region10: #{residual_block.5} parent=5 // pred_check_branch
      %143 = sbr.rel (%p140) target = $region12
    $region11: #{residual_block.5} parent=5 // pred_region
      %s144 = ssub.s32 %s10, 1
      // Predicated region
      $region13: #{residual_block.5} parent=11 // pred_check
        %p145 = pneg %p83
      $region14: #{residual_block.5} parent=11 // pred_check_branch
        %147 = sbr.rel (%p145) target = $region16
      $region15: #{residual_block.5} parent=11 // pred_region
        _
      $region16: #{residual_block.5} parent=11 // pred_fallthru
        _
      // Predicated region
      $region17: #{residual_block.5} parent=11 // pred_check
        %p148 = pneg %p104
      $region18: #{residual_block.5} parent=11 // pred_check_branch
        %150 = sbr.rel (%p148) target = $region20
      $region19: #{residual_block.5} parent=11 // pred_region
        _
      $region20: #{residual_block.5} parent=11 // pred_fallthru
        _
    $region12: #{residual_block.5} parent=5 // pred_fallthru
      _
    %p151 = scmp.lt.s32.totalorder %s10, 2
    // Predicated region
    $region21: #{residual_block.5} parent=5 // pred_check
      %p152 = pneg %p151
    $region22: #{residual_block.5} parent=5 // pred_check_branch
      %154 = sbr.rel (%p152) target = $region24
    $region23: #{residual_block.5} parent=5 // pred_region
      // Predicated region
      $region25: #{residual_block.5} parent=23 // pred_check
        %p155 = pneg %p30
      $region26: #{residual_block.5} parent=23 // pred_check_branch
        %157 = sbr.rel (%p155) target = $region28
      $region27: #{residual_block.5} parent=23 // pred_region
        %p158 = scmp.lt.s32.totalorder %s10, 1
        %s159 = scalar_select %p158, %s10, 1
        %s160 = smul.addr %s159, 4
        %s161 = smul.addr %s160, 8
        %s162 = scalar_lea.vmem %s0, %s161
      $region28: #{residual_block.5} parent=23 // pred_fallthru
        _
      // Predicated region
      $region29: #{residual_block.5} parent=23 // pred_check
        %p163 = pneg %p56
      $region30: #{residual_block.5} parent=23 // pred_check_branch
        %165 = sbr.rel (%p163) target = $region32
      $region31: #{residual_block.5} parent=23 // pred_region
        %p166 = scmp.lt.s32.totalorder %s10, 1
        %s167 = scalar_select %p166, %s10, 1
        %s168 = smul.addr %s167, 4
        %s169 = smul.addr %s168, 8
        %s170 = scalar_lea.vmem %s1, %s169
      $region32: #{residual_block.5} parent=23 // pred_fallthru
        _
    $region24: #{residual_block.5} parent=5 // pred_fallthru
      _
    %p171 = scmp.le.s32.totalorder 1, %s10
    %p172 = scmp.lt.s32.totalorder %s10, 3
    %p173 = pnand %p171, %p172
    %p174 = pneg %p173
    // Predicated region
    $region33: #{residual_block.5} parent=5 // pred_check
      _
    $region34: #{residual_block.5} parent=5 // pred_check_branch
      %176 = sbr.rel (%p173) target = $region36
    $region35: #{residual_block.5} parent=5 // pred_region
      %s177 = ssub.s32 %s10, 1
      %p178 = scmp.lt.s32.totalorder %s15, 1
      %s179 = scalar_select %p178, %s15, 1
      %s180 = smul.addr %s179, 4
      %s181 = smul.addr %s180, 8
      %s182 = scalar_lea.vmem %s0, %s181
      %p183 = pneg %p36
      %p184 = pneg %p33
      %p185 = scmp.lt.s32.totalorder %s15, 1
      %s186 = scalar_select %p185, %s15, 1
      %s187 = smul.addr %s186, 4
      %s188 = smul.addr %s187, 8
      %s189 = scalar_lea.vmem %s1, %s188
      %p190 = pneg %p62
      %p191 = pneg %p59
      %p192 = pneg %p83
      %p193 = pneg %p80
      %p194 = pneg %p104
      %p195 = pneg %p101
      %p196 = pneg %p130
      %p197 = pneg %p127
      %p198 = scmp.lt.s32.totalorder %s15, 1
      %s199 = scalar_select %p198, %s15, 1
      %s200 = smul.addr %s199, 4
      %s201 = smul.addr %s200, 8
      %s202 = scalar_lea.vmem %s4, %s201
      %p203 = scmp.lt.s32.totalorder %s15, 1
      %s204 = scalar_select %p203, %s15, 1
      %s205 = smul.addr %s204, 4
      %s206 = smul.addr %s205, 8
      %s207 = scalar_lea.vmem %s0, %s206
      %p208 = scmp.lt.s32.totalorder %s15, 1
      %s209 = scalar_select %p208, %s15, 1
      %s210 = smul.addr %s209, 4
      %s211 = smul.addr %s210, 8
      %s212 = scalar_lea.vmem %s1, %s211
      %p213 = scmp.lt.s32.totalorder %s15, 1
      %s214 = scalar_select %p213, %s15, 1
      %s215 = smul.addr %s214, 4
      %s216 = smul.addr %s215, 8
      %s217 = scalar_lea.vmem %s4, %s216
      %v218 = vld [vmem:[%s207] sm:$0xff]
      %v219 = vld [vmem:[%s207 + $0x8] sm:$0xff]
      %v220 = vld [vmem:[%s207 + $0x10] sm:$0xff]
      %v221 = vld [vmem:[%s207 + $0x18] sm:$0xff]
      %v222 = vld [vmem:[%s2] sm:$0xff]
      %v223 = vld [vmem:[%s2 + $0x8] sm:$0xff]
      %225 = vset.pattern.permute.xlu0 0
      %226 = vperm.xlu0 %225, %v222
      %v227 = vpop.permute.xlu0 %226
      %230 = vset.pattern.permute.xlu0 0
      %231 = vperm.xlu0 %230, %v223
      %v232 = vpop.permute.xlu0 %231
      %v234 = vmul.f32 %v218, %v227
      %v235 = vmul.f32 %v219, %v227
      %v236 = vmul.f32 %v220, %v232
      %v237 = vmul.f32 %v221, %v232
      %v238 = vld [vmem:[%s3] sm:$0xff]
      %v239 = vld [vmem:[%s3 + $0x8] sm:$0xff]
      %241 = vset.pattern.permute.xlu0 0
      %242 = vperm.xlu0 %241, %v238
      %v243 = vpop.permute.xlu0 %242
      %246 = vset.pattern.permute.xlu0 0
      %247 = vperm.xlu0 %246, %v239
      %v248 = vpop.permute.xlu0 %247
      %v250 = vadd.f32 %v234, %v243
      %v251 = vadd.f32 %v235, %v243
      %v252 = vadd.f32 %v236, %v248
      %v253 = vadd.f32 %v237, %v248
      %v254 = vld [vmem:[%s212] sm:$0xff]
      %v255 = vld [vmem:[%s212 + $0x8] sm:$0xff]
      %v256 = vld [vmem:[%s212 + $0x10] sm:$0xff]
      %v257 = vld [vmem:[%s212 + $0x18] sm:$0xff]
      %v258 = vadd.f32 %v250, %v254
      %v259 = vadd.f32 %v251, %v255
      %v260 = vadd.f32 %v252, %v256
      %v261 = vadd.f32 %v253, %v257
      %vm262 = vcmp.ge.f32.partialorder %v258, 0.0
      %vm263 = vcmp.ge.f32.partialorder %v259, 0.0
      %vm264 = vcmp.ge.f32.partialorder %v260, 0.0
      %vm265 = vcmp.ge.f32.partialorder %v261, 0.0
      %v266 = vmul.f32 %v258, 0.2
      %v267 = vmul.f32 %v259, 0.2
      %v268 = vmul.f32 %v260, 0.2
      %v269 = vmul.f32 %v261, 0.2
      %v270 = vsel %vm262, %v258, %v266
      %v271 = vsel %vm263, %v259, %v267
      %v272 = vsel %vm264, %v260, %v268
      %v273 = vsel %vm265, %v261, %v269
      %274 = vst [vmem:[%s217] sm:$0xff] %v270
      %275 = vst [vmem:[%s217 + $0x8] sm:$0xff] %v271
      %276 = vst [vmem:[%s217 + $0x10] sm:$0xff] %v272
      %277 = vst [vmem:[%s217 + $0x18] sm:$0xff] %v273
      %p278 = scmp.lt.s32.totalorder %s15, 1
      %s279 = scalar_select %p278, %s15, 1
      %s280 = smul.addr %s279, 4
      %s281 = smul.addr %s280, 8
      %s282 = scalar_lea.vmem %s4, %s281
      // Predicated region
      $region37: #{residual_block.5} parent=35 // pred_check
        %p283 = pneg %p127
      $region38: #{residual_block.5} parent=35 // pred_check_branch
        %285 = sbr.rel (%p283) target = $region40
      $region39: #{residual_block.5} parent=35 // pred_region
        _
      $region40: #{residual_block.5} parent=35 // pred_fallthru
        _
    $region36: #{residual_block.5} parent=5 // pred_fallthru
      _
    %p286 = scmp.le.s32.totalorder 2, %s10
    // Predicated region
    $region41: #{residual_block.5} parent=5 // pred_check
      %p287 = pneg %p286
    $region42: #{residual_block.5} parent=5 // pred_check_branch
      %289 = sbr.rel (%p287) target = $region44
    $region43: #{residual_block.5} parent=5 // pred_region
      %s290 = ssub.s32 %s10, 2
      // Predicated region
      $region45: #{residual_block.5} parent=43 // pred_check
        %p291 = pneg %p133
      $region46: #{residual_block.5} parent=43 // pred_check_branch
        %293 = sbr.rel (%p291) target = $region48
      $region47: #{residual_block.5} parent=43 // pred_region
        %p294 = scmp.lt.s32.totalorder %s16, 1
        %s295 = scalar_select %p294, %s16, 1
        %s296 = smul.addr %s295, 4
        %s297 = smul.addr %s296, 8
        %s298 = scalar_lea.vmem %s4, %s297
      $region48: #{residual_block.5} parent=43 // pred_fallthru
        _
    $region44: #{residual_block.5} parent=5 // pred_fallthru
      _
  $region6: #{residual_block.5} parent=0 // loop_footer
    %s14 = sadd.s32 1, %s10
  $region7: #{residual_block.5} parent=0 // loop_footer_branch
    %9 = sbr.rel target = $region3
  $region8: #{residual_block.5} parent=0 // loop_exit
    _

</llo_original>
